<compile_context>
chip_gen: v5e
topology: v5e:2x2
jax: 0.10.0
libtpu: 0.0.40
codegen_flags: <defaults>
</compile_context>

<pallas_src>
import math
import numpy as np
import jax
import jax.numpy as jnp
from jax.experimental import pallas as pl
from jax.experimental.pallas import tpu as pltpu

# ---- model / problem sizes (small, consistent with the module) -------------
B = 2          # batch
LT = 8         # target sequence length
LS = 8         # source sequence length
HID = 32       # hid_dim
N_HEADS = 4    # n_heads
HEAD = HID // N_HEADS
PF = 64        # pf_dim
SCALE = math.sqrt(HEAD)
INV_SCALE = 1.0 / SCALE
EPS = 1e-5     # nn.LayerNorm default eps

# ---- packed-parameter column layout (every segment starts at a 128-lane
# multiple so the static entry slices never cross / shift vreg lane tiles) ----
# Weight slab: (PF, W_COLS) f32.  HID-row weights live in rows [0:HID];
# pf_w2 uses rows [0:PF].
C_SA_QKV = 0        # (HID, 3*HID)  width  96
C_SA_O   = 128      # (HID, HID)    width  32
C_EA_Q   = 256      # (HID, HID)    width  32
C_EA_KV  = 384      # (HID, 2*HID)  width  64
C_EA_O   = 512      # (HID, HID)    width  32
C_PF1    = 640      # (HID, PF)     width  64
C_PF2    = 768      # (PF, HID)     width  32
W_COLS   = 896

# Bias slab: (1, B_COLS) f32.
BC_SA_QKV = 0       # 96
BC_SA_O   = 128     # 32
BC_EA_Q   = 256     # 32
BC_EA_KV  = 384     # 64
BC_EA_O   = 512     # 32
BC_PF1    = 640     # 64
BC_PF2    = 768     # 32
BC_LN_G   = 896     # 32
BC_LN_B   = 1024    # 32
B_COLS    = 1152

OUT_COLS = HID + N_HEADS * LS   # packed (out | attn) output width = 64


# ---- the Pallas kernel -------------------------------------------------------
def decoder_layer_kernel(trg_ref, src_ref, w_ref, b_ref, out_ref):
    rows_t = trg_ref.shape[0]          # B * LT
    bb = rows_t // LT                  # batch elements handled by this step

    trg = trg_ref[...]                 # (B*LT, HID)
    src = src_ref[...]                 # (B*LS, HID)

    # ---- one-time loads of the packed parameters (lane-aligned static slices)
    w_sa_qkv = w_ref[0:HID, C_SA_QKV:C_SA_QKV + 3 * HID]
    w_sa_o   = w_ref[0:HID, C_SA_O:C_SA_O + HID]
    w_ea_q   = w_ref[0:HID, C_EA_Q:C_EA_Q + HID]
    w_ea_kv  = w_ref[0:HID, C_EA_KV:C_EA_KV + 2 * HID]
    w_ea_o   = w_ref[0:HID, C_EA_O:C_EA_O + HID]
    w_pf1    = w_ref[0:HID, C_PF1:C_PF1 + PF]
    w_pf2    = w_ref[0:PF,  C_PF2:C_PF2 + HID]

    b_sa_qkv = b_ref[:, BC_SA_QKV:BC_SA_QKV + 3 * HID]
    b_sa_o   = b_ref[:, BC_SA_O:BC_SA_O + HID]
    b_ea_q   = b_ref[:, BC_EA_Q:BC_EA_Q + HID]
    b_ea_kv  = b_ref[:, BC_EA_KV:BC_EA_KV + 2 * HID]
    b_ea_o   = b_ref[:, BC_EA_O:BC_EA_O + HID]
    b_pf1    = b_ref[:, BC_PF1:BC_PF1 + PF]
    b_pf2    = b_ref[:, BC_PF2:BC_PF2 + HID]
    ln_g     = b_ref[:, BC_LN_G:BC_LN_G + HID]
    ln_b     = b_ref[:, BC_LN_B:BC_LN_B + HID]

    def layernorm(x):
        mu = jnp.mean(x, axis=-1, keepdims=True)
        var = jnp.mean((x - mu) ** 2, axis=-1, keepdims=True)
        return (x - mu) * jax.lax.rsqrt(var + EPS) * ln_g + ln_b

    def attention(q, k, v, wo, bo, lq, lk, exact_softmax, need_probs):
        """q: (bb*lq, HID); k, v: (bb*lk, HID); wo: (HID, HID), bo: (1, HID).

        Energies for all (batch, head) pairs are stacked along sublanes so a
        single max/exp/sum/normalize services everything; per-head contexts
        are lane-concatenated and ONE W_o matmul covers all rows.
        Returns (out (bb*lq, HID), lane-packed probs (bb*lq, N_HEADS*lk)|None).
        """
        # TODO(synk): check lowered MLIR for spurious lane rotates on the
        # 8-lane per-head slices; reorder the fused QKV layout if they appear.
        e_parts = []
        for bi in range(bb):
            qb = q[bi * lq:(bi + 1) * lq, :]
            kb = k[bi * lk:(bi + 1) * lk, :]
            for h in range(N_HEADS):
                lo = h * HEAD
                e_parts.append(jax.lax.dot_general(
                    qb[:, lo:lo + HEAD], kb[:, lo:lo + HEAD],
                    (((1,), (1,)), ((), ())),
                    preferred_element_type=jnp.float32))       # (lq, lk)
        # (bb*N_HEADS*lq, lk) — one batched softmax for every (batch, head)
        e = jnp.concatenate(e_parts, axis=0) * INV_SCALE
        e = e - jnp.max(e, axis=-1, keepdims=True)
        p = jnp.exp(e)
        s = jnp.sum(p, axis=-1, keepdims=True)
        if exact_softmax:
            p = p / s                                           # exported probs
        else:
            p = p * pl.reciprocal(s, approx=True)               # internal only

        ctx_rows = []
        attn_rows = []
        for bi in range(bb):
            vb = v[bi * lk:(bi + 1) * lk, :]
            heads = []
            p_heads = []
            for h in range(N_HEADS):
                r0 = (bi * N_HEADS + h) * lq
                ph = p[r0:r0 + lq, :]                           # (lq, lk)
                if need_probs:
                    p_heads.append(ph)
                heads.append(jnp.dot(ph, vb[:, h * HEAD:(h + 1) * HEAD],
                                     preferred_element_type=jnp.float32))
            ctx_rows.append(jnp.concatenate(heads, axis=-1))    # (lq, HID) in-vreg
            if need_probs:
                attn_rows.append(jnp.concatenate(p_heads, axis=-1))
        ctx = jnp.concatenate(ctx_rows, axis=0) if bb > 1 else ctx_rows[0]
        # single output projection over ALL rows / heads
        out = jnp.dot(ctx, wo, preferred_element_type=jnp.float32) + bo
        if need_probs:
            p_lane = (jnp.concatenate(attn_rows, axis=0)
                      if bb > 1 else attn_rows[0])              # (bb*lq, NH*lk)
        else:
            p_lane = None
        return out, p_lane

    # ===== self attention (fused Q|K|V projection over all rows) =====
    qkv = jnp.dot(trg, w_sa_qkv, preferred_element_type=jnp.float32) + b_sa_qkv
    sa_out, _ = attention(qkv[:, 0:HID], qkv[:, HID:2 * HID], qkv[:, 2 * HID:3 * HID],
                          w_sa_o, b_sa_o, LT, LT,
                          exact_softmax=False, need_probs=False)
    trg1 = layernorm(trg + sa_out)

    # ===== encoder attention (fused K|V projection of src) =====
    ea_q_all = jnp.dot(trg1, w_ea_q, preferred_element_type=jnp.float32) + b_ea_q
    ea_kv_all = jnp.dot(src, w_ea_kv, preferred_element_type=jnp.float32) + b_ea_kv
    ea_out, attn_lane = attention(ea_q_all,
                                  ea_kv_all[:, 0:HID], ea_kv_all[:, HID:2 * HID],
                                  w_ea_o, b_ea_o, LT, LS,
                                  exact_softmax=True, need_probs=True)
    trg2 = layernorm(trg1 + ea_out)

    # ===== positionwise feedforward (Conv1d k=1 == matmul) =====
    hdn = jnp.maximum(
        jnp.dot(trg2, w_pf1, preferred_element_type=jnp.float32) + b_pf1, 0.0)
    ff = jnp.dot(hdn, w_pf2, preferred_element_type=jnp.float32) + b_pf2
    out_final = layernorm(trg2 + ff)                            # (B*LT, HID)

    # single lane-packed store: [ out | attn ]  -> one writeback DMA
    out_ref[...] = jnp.concatenate([out_final, attn_lane], axis=-1)


# ---- wrapper ----------------------------------------------------------------
def decoder_layer(trg, src, w_slab, b_slab):
    """trg: (B, LT, HID) f32, src: (B, LS, HID) f32.  Params pre-packed into
    one weight slab (PF, W_COLS) and one bias slab (1, B_COLS)."""
    Bn, Lt, Hd = trg.shape
    Ls = src.shape[1]
    rows_t = Bn * Lt
    rows_s = Bn * Ls

    trg2d = trg.reshape(rows_t, Hd)
    src2d = src.reshape(rows_s, Hd)

    slab = pl.pallas_call(
        decoder_layer_kernel,
        out_shape=jax.ShapeDtypeStruct((rows_t, OUT_COLS), jnp.float32),
        grid_spec=pltpu.PrefetchScalarGridSpec(
            num_scalar_prefetch=0,
            grid=(1,),
            in_specs=[
                pl.BlockSpec((rows_t, Hd), lambda i: (0, 0)),
                pl.BlockSpec((rows_s, Hd), lambda i: (0, 0)),
                pl.BlockSpec(w_slab.shape, lambda i: (0, 0)),
                pl.BlockSpec(b_slab.shape, lambda i: (0, 0)),
            ],
            out_specs=pl.BlockSpec((rows_t, OUT_COLS), lambda i: (0, 0)),
        ),
        compiler_params=pltpu.CompilerParams(
            dimension_semantics=("arbitrary",)),
    )(trg2d, src2d, w_slab, b_slab)

    out = slab[:, 0:Hd].reshape(Bn, Lt, Hd)
    # kernel emits lane-dense (B*LT, N_HEADS*LS); un-pack to PyTorch layout here
    attn = slab[:, Hd:Hd + N_HEADS * Ls].reshape(Bn, Lt, N_HEADS, Ls)
    attn = attn.transpose(0, 2, 1, 3)
    return out, attn


# ---- parameter init (deterministic, PyTorch-like shapes) --------------------
def init_params(key):
    keys = iter(jax.random.split(key, 40))

    def linear(in_dim, out_dim):
        # PyTorch nn.Linear stores (out, in); transpose to (in, out) so the
        # kernel does y = x @ W + b.  Conv1d(k=1) weight (out, in, 1) is identical.
        w = jax.random.normal(next(keys), (out_dim, in_dim), jnp.float32) * 0.1
        b = jax.random.normal(next(keys), (out_dim,), jnp.float32) * 0.1
        return w.T, b.reshape(1, out_dim)

    def attn_block():
        p = []
        for _ in range(4):                      # w_q, w_k, w_v, fc
            w, b = linear(HID, HID)
            p += [w, b]
        return p

    sa = attn_block()
    ea = attn_block()
    ln_g = jnp.ones((1, HID), jnp.float32)      # nn.LayerNorm init
    ln_b = jnp.zeros((1, HID), jnp.float32)
    pf_w1, pf_b1 = linear(HID, PF)              # Conv1d(hid, pf, 1)
    pf_w2, pf_b2 = linear(PF, HID)              # Conv1d(pf, hid, 1)
    return tuple(sa + ea + [ln_g, ln_b, pf_w1, pf_b1, pf_w2, pf_b2])


def pack_params(P):
    """Pack the 22 per-layer tensors into one lane-aligned weight slab and one
    lane-aligned bias slab (each segment starts at a multiple of 128 lanes)."""
    (sa_wq, sa_bq, sa_wk, sa_bk, sa_wv, sa_bv, sa_wo, sa_bo,
     ea_wq, ea_bq, ea_wk, ea_bk, ea_wv, ea_bv, ea_wo, ea_bo,
     ln_g, ln_b, pf_w1, pf_b1, pf_w2, pf_b2) = P

    w_slab = jnp.zeros((PF, W_COLS), jnp.float32)

    def put_w(slab, col, w):
        r, c = w.shape
        return slab.at[0:r, col:col + c].set(w)

    w_slab = put_w(w_slab, C_SA_QKV, jnp.concatenate([sa_wq, sa_wk, sa_wv], axis=1))
    w_slab = put_w(w_slab, C_SA_O, sa_wo)
    w_slab = put_w(w_slab, C_EA_Q, ea_wq)
    w_slab = put_w(w_slab, C_EA_KV, jnp.concatenate([ea_wk, ea_wv], axis=1))
    w_slab = put_w(w_slab, C_EA_O, ea_wo)
    w_slab = put_w(w_slab, C_PF1, pf_w1)
    w_slab = put_w(w_slab, C_PF2, pf_w2)

    b_slab = jnp.zeros((1, B_COLS), jnp.float32)

    def put_b(slab, col, b):
        return slab.at[:, col:col + b.shape[1]].set(b)

    b_slab = put_b(b_slab, BC_SA_QKV, jnp.concatenate([sa_bq, sa_bk, sa_bv], axis=1))
    b_slab = put_b(b_slab, BC_SA_O, sa_bo)
    b_slab = put_b(b_slab, BC_EA_Q, ea_bq)
    b_slab = put_b(b_slab, BC_EA_KV, jnp.concatenate([ea_bk, ea_bv], axis=1))
    b_slab = put_b(b_slab, BC_EA_O, ea_bo)
    b_slab = put_b(b_slab, BC_PF1, pf_b1)
    b_slab = put_b(b_slab, BC_PF2, pf_b2)
    b_slab = put_b(b_slab, BC_LN_G, ln_g)
    b_slab = put_b(b_slab, BC_LN_B, ln_b)

    assert w_slab.shape == (PF, W_COLS) and b_slab.shape == (1, B_COLS)
    return w_slab, b_slab


# ---- pure-JAX reference (same math, batched) for a sanity check -------------
def ref_forward(trg, src, P):
    (sa_wq, sa_bq, sa_wk, sa_bk, sa_wv, sa_bv, sa_wo, sa_bo,
     ea_wq, ea_bq, ea_wk, ea_bk, ea_wv, ea_bv, ea_wo, ea_bo,
     ln_g, ln_b, pf_w1, pf_b1, pf_w2, pf_b2) = P

    def mha(q, kv, wq, bq, wk, bk, wv, bv, wo, bo):
        Q = q @ wq + bq
        K = kv @ wk + bk
        V = kv @ wv + bv
        Bn, Lq, _ = Q.shape
        Lk = K.shape[1]
        Qh = Q.reshape(Bn, Lq, N_HEADS, HEAD).transpose(0, 2, 1, 3)
        Kh = K.reshape(Bn, Lk, N_HEADS, HEAD).transpose(0, 2, 1, 3)
        Vh = V.reshape(Bn, Lk, N_HEADS, HEAD).transpose(0, 2, 1, 3)
        e = jnp.einsum("bhqd,bhkd->bhqk", Qh, Kh) / SCALE
        p = jax.nn.softmax(e, axis=-1)
        x = jnp.einsum("bhqk,bhkd->bhqd", p, Vh)
        x = x.transpose(0, 2, 1, 3).reshape(Bn, Lq, HID)
        return x @ wo + bo, p

    def ln(x):
        mu = x.mean(-1, keepdims=True)
        var = ((x - mu) ** 2).mean(-1, keepdims=True)
        return (x - mu) / jnp.sqrt(var + EPS) * ln_g + ln_b

    sa_out, _ = mha(trg, trg, sa_wq, sa_bq, sa_wk, sa_bk, sa_wv, sa_bv, sa_wo, sa_bo)
    t1 = ln(trg + sa_out)
    ea_out, attn = mha(t1, src, ea_wq, ea_bq, ea_wk, ea_bk, ea_wv, ea_bv, ea_wo, ea_bo)
    t2 = ln(t1 + ea_out)
    ff = jnp.maximum(t2 @ pf_w1 + pf_b1, 0.0) @ pf_w2 + pf_b2
    t3 = ln(t2 + ff)
    return t3, attn


# ---- main -------------------------------------------------------------------
if __name__ == "__main__":
    key = jax.random.PRNGKey(0)
    k_trg, k_src, k_par = jax.random.split(key, 3)
    trg = jax.random.normal(k_trg, (B, LT, HID), jnp.float32)
    src = jax.random.normal(k_src, (B, LS, HID), jnp.float32)
    params = init_params(k_par)
    w_slab, b_slab = pack_params(params)

    out, attn = decoder_layer(trg, src, w_slab, b_slab)
    out, attn = jax.block_until_ready((out, attn))

    # sanity check against pure-JAX reference.
    #  - out tolerance loosened slightly for the EUP approximate reciprocal in
    #    the (internal) self-attention softmax denominator.
    #  - attn uses an exact softmax divide in the kernel -> tight tolerance.
    ref_out, ref_attn = ref_forward(trg, src, params)
    np.testing.assert_allclose(np.asarray(out), np.asarray(ref_out),
                               rtol=1e-2, atol=1e-2)
    np.testing.assert_allclose(np.asarray(attn), np.asarray(ref_attn),
                               rtol=1e-3, atol=1e-4)

    # TODO(synk): trg_mask / src_mask (masked_fill of attention energies) are
    # not implemented; the PyTorch forward defaults them to None.
    print("KERNEL_OK")
</pallas_src>

<mosaic_0001>
module attributes {stable_mosaic.version = 11 : i64} {
  func.func @decoder_layer_kernel(%arg0: i32, %arg1: memref<16x32xf32, #tpu.memory_space<vmem>>, %arg2: memref<16x32xf32, #tpu.memory_space<vmem>>, %arg3: memref<64x896xf32, #tpu.memory_space<vmem>>, %arg4: memref<1x1152xf32, #tpu.memory_space<vmem>>, %arg5: memref<16x64xf32, #tpu.memory_space<vmem>>) attributes {dimension_semantics = [#tpu.dimension_semantics<arbitrary>], iteration_bounds = array<i64: 1>, scalar_prefetch = 0 : i64, scratch_operands = 0 : i64, tpu.core_type = #tpu.core_type<tc>, window_params = [{pipeline_mode = #tpu.pipeline_mode<synchronous>, transform_indices = @transform_0, window_bounds = array<i64: 16, 32>}, {pipeline_mode = #tpu.pipeline_mode<synchronous>, transform_indices = @transform_1, window_bounds = array<i64: 16, 32>}, {pipeline_mode = #tpu.pipeline_mode<synchronous>, transform_indices = @transform_2, window_bounds = array<i64: 64, 896>}, {pipeline_mode = #tpu.pipeline_mode<synchronous>, transform_indices = @transform_3, window_bounds = array<i64: 1, 1152>}, {pipeline_mode = #tpu.pipeline_mode<synchronous>, transform_indices = @transform_4, window_bounds = array<i64: 16, 64>}]} {
    %c0 = arith.constant 0 : index
    %c0_0 = arith.constant 0 : index
    %0 = vector.load %arg1[%c0, %c0_0] : memref<16x32xf32, #tpu.memory_space<vmem>>, vector<16x32xf32>
    %c0_1 = arith.constant 0 : index
    %c0_2 = arith.constant 0 : index
    %1 = vector.load %arg2[%c0_1, %c0_2] : memref<16x32xf32, #tpu.memory_space<vmem>>, vector<16x32xf32>
    %c0_3 = arith.constant 0 : index
    %c0_4 = arith.constant 0 : index
    %2 = vector.load %arg3[%c0_3, %c0_4] : memref<64x896xf32, #tpu.memory_space<vmem>>, vector<32x96xf32>
    %c0_5 = arith.constant 0 : index
    %c128 = arith.constant 128 : index
    %3 = vector.load %arg3[%c0_5, %c128] : memref<64x896xf32, #tpu.memory_space<vmem>>, vector<32x32xf32>
    %c0_6 = arith.constant 0 : index
    %c256 = arith.constant 256 : index
    %4 = vector.load %arg3[%c0_6, %c256] : memref<64x896xf32, #tpu.memory_space<vmem>>, vector<32x32xf32>
    %c0_7 = arith.constant 0 : index
    %c384 = arith.constant 384 : index
    %5 = vector.load %arg3[%c0_7, %c384] : memref<64x896xf32, #tpu.memory_space<vmem>>, vector<32x64xf32>
    %c0_8 = arith.constant 0 : index
    %c512 = arith.constant 512 : index
    %6 = vector.load %arg3[%c0_8, %c512] : memref<64x896xf32, #tpu.memory_space<vmem>>, vector<32x32xf32>
    %c0_9 = arith.constant 0 : index
    %c640 = arith.constant 640 : index
    %7 = vector.load %arg3[%c0_9, %c640] : memref<64x896xf32, #tpu.memory_space<vmem>>, vector<32x64xf32>
    %c0_10 = arith.constant 0 : index
    %c768 = arith.constant 768 : index
    %8 = vector.load %arg3[%c0_10, %c768] : memref<64x896xf32, #tpu.memory_space<vmem>>, vector<64x32xf32>
    %c0_11 = arith.constant 0 : index
    %c0_12 = arith.constant 0 : index
    %9 = vector.load %arg4[%c0_11, %c0_12] : memref<1x1152xf32, #tpu.memory_space<vmem>>, vector<1x96xf32>
    %c0_13 = arith.constant 0 : index
    %c128_14 = arith.constant 128 : index
    %10 = vector.load %arg4[%c0_13, %c128_14] : memref<1x1152xf32, #tpu.memory_space<vmem>>, vector<1x32xf32>
    %c0_15 = arith.constant 0 : index
    %c256_16 = arith.constant 256 : index
    %11 = vector.load %arg4[%c0_15, %c256_16] : memref<1x1152xf32, #tpu.memory_space<vmem>>, vector<1x32xf32>
    %c0_17 = arith.constant 0 : index
    %c384_18 = arith.constant 384 : index
    %12 = vector.load %arg4[%c0_17, %c384_18] : memref<1x1152xf32, #tpu.memory_space<vmem>>, vector<1x64xf32>
    %c0_19 = arith.constant 0 : index
    %c512_20 = arith.constant 512 : index
    %13 = vector.load %arg4[%c0_19, %c512_20] : memref<1x1152xf32, #tpu.memory_space<vmem>>, vector<1x32xf32>
    %c0_21 = arith.constant 0 : index
    %c640_22 = arith.constant 640 : index
    %14 = vector.load %arg4[%c0_21, %c640_22] : memref<1x1152xf32, #tpu.memory_space<vmem>>, vector<1x64xf32>
    %c0_23 = arith.constant 0 : index
    %c768_24 = arith.constant 768 : index
    %15 = vector.load %arg4[%c0_23, %c768_24] : memref<1x1152xf32, #tpu.memory_space<vmem>>, vector<1x32xf32>
    %c0_25 = arith.constant 0 : index
    %c896 = arith.constant 896 : index
    %16 = vector.load %arg4[%c0_25, %c896] : memref<1x1152xf32, #tpu.memory_space<vmem>>, vector<1x32xf32>
    %c0_26 = arith.constant 0 : index
    %c1024 = arith.constant 1024 : index
    %17 = vector.load %arg4[%c0_26, %c1024] : memref<1x1152xf32, #tpu.memory_space<vmem>>, vector<1x32xf32>
    %cst = arith.constant dense<0.000000e+00> : vector<16x96xf32>
    %18 = tpu.matmul %0, %2, %cst {dimension_numbers = #tpu.dot_dimension_numbers<[1], [0], [0], [1], [0, 0, 1, 1], [], []>} : vector<16x32xf32>, vector<32x96xf32>, vector<16x96xf32> -> vector<16x96xf32>
    %19 = vector.broadcast %9 : vector<1x96xf32> to vector<16x96xf32>
    %20 = arith.addf %18, %19 : vector<16x96xf32>
    %21 = vector.extract_strided_slice %20 {offsets = [0, 0], sizes = [16, 32], strides = [1, 1]} : vector<16x96xf32> to vector<16x32xf32>
    %22 = vector.extract_strided_slice %20 {offsets = [0, 32], sizes = [16, 32], strides = [1, 1]} : vector<16x96xf32> to vector<16x32xf32>
    %23 = vector.extract_strided_slice %20 {offsets = [0, 64], sizes = [16, 32], strides = [1, 1]} : vector<16x96xf32> to vector<16x32xf32>
    %24 = vector.extract_strided_slice %21 {offsets = [0, 0], sizes = [8, 32], strides = [1, 1]} : vector<16x32xf32> to vector<8x32xf32>
    %25 = vector.extract_strided_slice %22 {offsets = [0, 0], sizes = [8, 32], strides = [1, 1]} : vector<16x32xf32> to vector<8x32xf32>
    %26 = vector.extract_strided_slice %24 {offsets = [0, 0], sizes = [8, 8], strides = [1, 1]} : vector<8x32xf32> to vector<8x8xf32>
    %27 = vector.extract_strided_slice %25 {offsets = [0, 0], sizes = [8, 8], strides = [1, 1]} : vector<8x32xf32> to vector<8x8xf32>
    %cst_27 = arith.constant dense<0.000000e+00> : vector<8x8xf32>
    %28 = tpu.matmul %26, %27, %cst_27 {dimension_numbers = #tpu.dot_dimension_numbers<[1], [1], [0], [0], [0, 0, 1, 0], [], []>} : vector<8x8xf32>, vector<8x8xf32>, vector<8x8xf32> -> vector<8x8xf32>
    %29 = vector.extract_strided_slice %24 {offsets = [0, 8], sizes = [8, 8], strides = [1, 1]} : vector<8x32xf32> to vector<8x8xf32>
    %30 = vector.extract_strided_slice %25 {offsets = [0, 8], sizes = [8, 8], strides = [1, 1]} : vector<8x32xf32> to vector<8x8xf32>
    %cst_28 = arith.constant dense<0.000000e+00> : vector<8x8xf32>
    %31 = tpu.matmul %29, %30, %cst_28 {dimension_numbers = #tpu.dot_dimension_numbers<[1], [1], [0], [0], [0, 0, 1, 0], [], []>} : vector<8x8xf32>, vector<8x8xf32>, vector<8x8xf32> -> vector<8x8xf32>
    %32 = vector.extract_strided_slice %24 {offsets = [0, 16], sizes = [8, 8], strides = [1, 1]} : vector<8x32xf32> to vector<8x8xf32>
    %33 = vector.extract_strided_slice %25 {offsets = [0, 16], sizes = [8, 8], strides = [1, 1]} : vector<8x32xf32> to vector<8x8xf32>
    %cst_29 = arith.constant dense<0.000000e+00> : vector<8x8xf32>
    %34 = tpu.matmul %32, %33, %cst_29 {dimension_numbers = #tpu.dot_dimension_numbers<[1], [1], [0], [0], [0, 0, 1, 0], [], []>} : vector<8x8xf32>, vector<8x8xf32>, vector<8x8xf32> -> vector<8x8xf32>
    %35 = vector.extract_strided_slice %24 {offsets = [0, 24], sizes = [8, 8], strides = [1, 1]} : vector<8x32xf32> to vector<8x8xf32>
    %36 = vector.extract_strided_slice %25 {offsets = [0, 24], sizes = [8, 8], strides = [1, 1]} : vector<8x32xf32> to vector<8x8xf32>
    %cst_30 = arith.constant dense<0.000000e+00> : vector<8x8xf32>
    %37 = tpu.matmul %35, %36, %cst_30 {dimension_numbers = #tpu.dot_dimension_numbers<[1], [1], [0], [0], [0, 0, 1, 0], [], []>} : vector<8x8xf32>, vector<8x8xf32>, vector<8x8xf32> -> vector<8x8xf32>
    %38 = vector.extract_strided_slice %21 {offsets = [8, 0], sizes = [8, 32], strides = [1, 1]} : vector<16x32xf32> to vector<8x32xf32>
    %39 = vector.extract_strided_slice %22 {offsets = [8, 0], sizes = [8, 32], strides = [1, 1]} : vector<16x32xf32> to vector<8x32xf32>
    %40 = vector.extract_strided_slice %38 {offsets = [0, 0], sizes = [8, 8], strides = [1, 1]} : vector<8x32xf32> to vector<8x8xf32>
    %41 = vector.extract_strided_slice %39 {offsets = [0, 0], sizes = [8, 8], strides = [1, 1]} : vector<8x32xf32> to vector<8x8xf32>
    %cst_31 = arith.constant dense<0.000000e+00> : vector<8x8xf32>
    %42 = tpu.matmul %40, %41, %cst_31 {dimension_numbers = #tpu.dot_dimension_numbers<[1], [1], [0], [0], [0, 0, 1, 0], [], []>} : vector<8x8xf32>, vector<8x8xf32>, vector<8x8xf32> -> vector<8x8xf32>
    %43 = vector.extract_strided_slice %38 {offsets = [0, 8], sizes = [8, 8], strides = [1, 1]} : vector<8x32xf32> to vector<8x8xf32>
    %44 = vector.extract_strided_slice %39 {offsets = [0, 8], sizes = [8, 8], strides = [1, 1]} : vector<8x32xf32> to vector<8x8xf32>
    %cst_32 = arith.constant dense<0.000000e+00> : vector<8x8xf32>
    %45 = tpu.matmul %43, %44, %cst_32 {dimension_numbers = #tpu.dot_dimension_numbers<[1], [1], [0], [0], [0, 0, 1, 0], [], []>} : vector<8x8xf32>, vector<8x8xf32>, vector<8x8xf32> -> vector<8x8xf32>
    %46 = vector.extract_strided_slice %38 {offsets = [0, 16], sizes = [8, 8], strides = [1, 1]} : vector<8x32xf32> to vector<8x8xf32>
    %47 = vector.extract_strided_slice %39 {offsets = [0, 16], sizes = [8, 8], strides = [1, 1]} : vector<8x32xf32> to vector<8x8xf32>
    %cst_33 = arith.constant dense<0.000000e+00> : vector<8x8xf32>
    %48 = tpu.matmul %46, %47, %cst_33 {dimension_numbers = #tpu.dot_dimension_numbers<[1], [1], [0], [0], [0, 0, 1, 0], [], []>} : vector<8x8xf32>, vector<8x8xf32>, vector<8x8xf32> -> vector<8x8xf32>
    %49 = vector.extract_strided_slice %38 {offsets = [0, 24], sizes = [8, 8], strides = [1, 1]} : vector<8x32xf32> to vector<8x8xf32>
    %50 = vector.extract_strided_slice %39 {offsets = [0, 24], sizes = [8, 8], strides = [1, 1]} : vector<8x32xf32> to vector<8x8xf32>
    %cst_34 = arith.constant dense<0.000000e+00> : vector<8x8xf32>
    %51 = tpu.matmul %49, %50, %cst_34 {dimension_numbers = #tpu.dot_dimension_numbers<[1], [1], [0], [0], [0, 0, 1, 0], [], []>} : vector<8x8xf32>, vector<8x8xf32>, vector<8x8xf32> -> vector<8x8xf32>
    %52 = tpu.concatenate %28, %31, %34, %37, %42, %45, %48, %51 in 0 : vector<8x8xf32>, vector<8x8xf32>, vector<8x8xf32>, vector<8x8xf32>, vector<8x8xf32>, vector<8x8xf32>, vector<8x8xf32>, vector<8x8xf32> -> vector<64x8xf32>
    %cst_35 = arith.constant 0.353553385 : f32
    %53 = vector.broadcast %cst_35 : f32 to vector<64x8xf32>
    %54 = arith.mulf %52, %53 : vector<64x8xf32>
    %cst_36 = arith.constant dense<0xFF800000> : vector<64xf32>
    %55 = vector.multi_reduction <maximumf>, %54, %cst_36 [1] : vector<64x8xf32> to vector<64xf32>
    %56 = vector.shape_cast %55 : vector<64xf32> to vector<64x1xf32>
    %57 = vector.broadcast %56 : vector<64x1xf32> to vector<64x8xf32>
    %58 = arith.subf %54, %57 : vector<64x8xf32>
    %59 = math.exp %58 : vector<64x8xf32>
    %cst_37 = arith.constant dense<0.000000e+00> : vector<64xf32>
    %60 = vector.multi_reduction <add>, %59, %cst_37 [1] : vector<64x8xf32> to vector<64xf32>
    %61 = vector.shape_cast %60 : vector<64xf32> to vector<64x1xf32>
    %62 = tpu.reciprocal %61 {approx = true} : vector<64x1xf32> -> vector<64x1xf32>
    %63 = vector.broadcast %62 : vector<64x1xf32> to vector<64x8xf32>
    %64 = arith.mulf %59, %63 : vector<64x8xf32>
    %65 = vector.extract_strided_slice %23 {offsets = [0, 0], sizes = [8, 32], strides = [1, 1]} : vector<16x32xf32> to vector<8x32xf32>
    %66 = vector.extract_strided_slice %64 {offsets = [0, 0], sizes = [8, 8], strides = [1, 1]} : vector<64x8xf32> to vector<8x8xf32>
    %67 = vector.extract_strided_slice %65 {offsets = [0, 0], sizes = [8, 8], strides = [1, 1]} : vector<8x32xf32> to vector<8x8xf32>
    %cst_38 = arith.constant dense<0.000000e+00> : vector<8x8xf32>
    %68 = tpu.matmul %66, %67, %cst_38 {dimension_numbers = #tpu.dot_dimension_numbers<[1], [0], [0], [1], [0, 0, 1, 1], [], []>} : vector<8x8xf32>, vector<8x8xf32>, vector<8x8xf32> -> vector<8x8xf32>
    %69 = vector.extract_strided_slice %64 {offsets = [8, 0], sizes = [8, 8], strides = [1, 1]} : vector<64x8xf32> to vector<8x8xf32>
    %70 = vector.extract_strided_slice %65 {offsets = [0, 8], sizes = [8, 8], strides = [1, 1]} : vector<8x32xf32> to vector<8x8xf32>
    %cst_39 = arith.constant dense<0.000000e+00> : vector<8x8xf32>
    %71 = tpu.matmul %69, %70, %cst_39 {dimension_numbers = #tpu.dot_dimension_numbers<[1], [0], [0], [1], [0, 0, 1, 1], [], []>} : vector<8x8xf32>, vector<8x8xf32>, vector<8x8xf32> -> vector<8x8xf32>
    %72 = vector.extract_strided_slice %64 {offsets = [16, 0], sizes = [8, 8], strides = [1, 1]} : vector<64x8xf32> to vector<8x8xf32>
    %73 = vector.extract_strided_slice %65 {offsets = [0, 16], sizes = [8, 8], strides = [1, 1]} : vector<8x32xf32> to vector<8x8xf32>
    %cst_40 = arith.constant dense<0.000000e+00> : vector<8x8xf32>
    %74 = tpu.matmul %72, %73, %cst_40 {dimension_numbers = #tpu.dot_dimension_numbers<[1], [0], [0], [1], [0, 0, 1, 1], [], []>} : vector<8x8xf32>, vector<8x8xf32>, vector<8x8xf32> -> vector<8x8xf32>
    %75 = vector.extract_strided_slice %64 {offsets = [24, 0], sizes = [8, 8], strides = [1, 1]} : vector<64x8xf32> to vector<8x8xf32>
    %76 = vector.extract_strided_slice %65 {offsets = [0, 24], sizes = [8, 8], strides = [1, 1]} : vector<8x32xf32> to vector<8x8xf32>
    %cst_41 = arith.constant dense<0.000000e+00> : vector<8x8xf32>
    %77 = tpu.matmul %75, %76, %cst_41 {dimension_numbers = #tpu.dot_dimension_numbers<[1], [0], [0], [1], [0, 0, 1, 1], [], []>} : vector<8x8xf32>, vector<8x8xf32>, vector<8x8xf32> -> vector<8x8xf32>
    %78 = tpu.concatenate %68, %71, %74, %77 in 1 : vector<8x8xf32>, vector<8x8xf32>, vector<8x8xf32>, vector<8x8xf32> -> vector<8x32xf32>
    %79 = vector.extract_strided_slice %23 {offsets = [8, 0], sizes = [8, 32], strides = [1, 1]} : vector<16x32xf32> to vector<8x32xf32>
    %80 = vector.extract_strided_slice %64 {offsets = [32, 0], sizes = [8, 8], strides = [1, 1]} : vector<64x8xf32> to vector<8x8xf32>
    %81 = vector.extract_strided_slice %79 {offsets = [0, 0], sizes = [8, 8], strides = [1, 1]} : vector<8x32xf32> to vector<8x8xf32>
    %cst_42 = arith.constant dense<0.000000e+00> : vector<8x8xf32>
    %82 = tpu.matmul %80, %81, %cst_42 {dimension_numbers = #tpu.dot_dimension_numbers<[1], [0], [0], [1], [0, 0, 1, 1], [], []>} : vector<8x8xf32>, vector<8x8xf32>, vector<8x8xf32> -> vector<8x8xf32>
    %83 = vector.extract_strided_slice %64 {offsets = [40, 0], sizes = [8, 8], strides = [1, 1]} : vector<64x8xf32> to vector<8x8xf32>
    %84 = vector.extract_strided_slice %79 {offsets = [0, 8], sizes = [8, 8], strides = [1, 1]} : vector<8x32xf32> to vector<8x8xf32>
    %cst_43 = arith.constant dense<0.000000e+00> : vector<8x8xf32>
    %85 = tpu.matmul %83, %84, %cst_43 {dimension_numbers = #tpu.dot_dimension_numbers<[1], [0], [0], [1], [0, 0, 1, 1], [], []>} : vector<8x8xf32>, vector<8x8xf32>, vector<8x8xf32> -> vector<8x8xf32>
    %86 = vector.extract_strided_slice %64 {offsets = [48, 0], sizes = [8, 8], strides = [1, 1]} : vector<64x8xf32> to vector<8x8xf32>
    %87 = vector.extract_strided_slice %79 {offsets = [0, 16], sizes = [8, 8], strides = [1, 1]} : vector<8x32xf32> to vector<8x8xf32>
    %cst_44 = arith.constant dense<0.000000e+00> : vector<8x8xf32>
    %88 = tpu.matmul %86, %87, %cst_44 {dimension_numbers = #tpu.dot_dimension_numbers<[1], [0], [0], [1], [0, 0, 1, 1], [], []>} : vector<8x8xf32>, vector<8x8xf32>, vector<8x8xf32> -> vector<8x8xf32>
    %89 = vector.extract_strided_slice %64 {offsets = [56, 0], sizes = [8, 8], strides = [1, 1]} : vector<64x8xf32> to vector<8x8xf32>
    %90 = vector.extract_strided_slice %79 {offsets = [0, 24], sizes = [8, 8], strides = [1, 1]} : vector<8x32xf32> to vector<8x8xf32>
    %cst_45 = arith.constant dense<0.000000e+00> : vector<8x8xf32>
    %91 = tpu.matmul %89, %90, %cst_45 {dimension_numbers = #tpu.dot_dimension_numbers<[1], [0], [0], [1], [0, 0, 1, 1], [], []>} : vector<8x8xf32>, vector<8x8xf32>, vector<8x8xf32> -> vector<8x8xf32>
    %92 = tpu.concatenate %82, %85, %88, %91 in 1 : vector<8x8xf32>, vector<8x8xf32>, vector<8x8xf32>, vector<8x8xf32> -> vector<8x32xf32>
    %93 = tpu.concatenate %78, %92 in 0 : vector<8x32xf32>, vector<8x32xf32> -> vector<16x32xf32>
    %cst_46 = arith.constant dense<0.000000e+00> : vector<16x32xf32>
    %94 = tpu.matmul %93, %3, %cst_46 {dimension_numbers = #tpu.dot_dimension_numbers<[1], [0], [0], [1], [0, 0, 1, 1], [], []>} : vector<16x32xf32>, vector<32x32xf32>, vector<16x32xf32> -> vector<16x32xf32>
    %95 = vector.broadcast %10 : vector<1x32xf32> to vector<16x32xf32>
    %96 = arith.addf %94, %95 : vector<16x32xf32>
    %97 = arith.addf %0, %96 : vector<16x32xf32>
    %cst_47 = arith.constant dense<0.000000e+00> : vector<16xf32>
    %98 = vector.multi_reduction <add>, %97, %cst_47 [1] : vector<16x32xf32> to vector<16xf32>
    %99 = vector.shape_cast %98 : vector<16xf32> to vector<16x1xf32>
    %cst_48 = arith.constant 3.200000e+01 : f32
    %100 = vector.broadcast %cst_48 : f32 to vector<16x1xf32>
    %101 = arith.divf %99, %100 : vector<16x1xf32>
    %102 = vector.broadcast %101 : vector<16x1xf32> to vector<16x32xf32>
    %103 = arith.subf %97, %102 : vector<16x32xf32>
    %104 = arith.mulf %103, %103 : vector<16x32xf32>
    %cst_49 = arith.constant dense<0.000000e+00> : vector<16xf32>
    %105 = vector.multi_reduction <add>, %104, %cst_49 [1] : vector<16x32xf32> to vector<16xf32>
    %106 = vector.shape_cast %105 : vector<16xf32> to vector<16x1xf32>
    %cst_50 = arith.constant 3.200000e+01 : f32
    %107 = vector.broadcast %cst_50 : f32 to vector<16x1xf32>
    %108 = arith.divf %106, %107 : vector<16x1xf32>
    %109 = vector.broadcast %101 : vector<16x1xf32> to vector<16x32xf32>
    %110 = arith.subf %97, %109 : vector<16x32xf32>
    %cst_51 = arith.constant 9.99999974E-6 : f32
    %111 = vector.broadcast %cst_51 : f32 to vector<16x1xf32>
    %112 = arith.addf %108, %111 : vector<16x1xf32>
    %113 = math.rsqrt %112 : vector<16x1xf32>
    %114 = vector.broadcast %113 : vector<16x1xf32> to vector<16x32xf32>
    %115 = arith.mulf %110, %114 : vector<16x32xf32>
    %116 = vector.broadcast %16 : vector<1x32xf32> to vector<16x32xf32>
    %117 = arith.mulf %115, %116 : vector<16x32xf32>
    %118 = vector.broadcast %17 : vector<1x32xf32> to vector<16x32xf32>
    %119 = arith.addf %117, %118 : vector<16x32xf32>
    %cst_52 = arith.constant dense<0.000000e+00> : vector<16x32xf32>
    %120 = tpu.matmul %119, %4, %cst_52 {dimension_numbers = #tpu.dot_dimension_numbers<[1], [0], [0], [1], [0, 0, 1, 1], [], []>} : vector<16x32xf32>, vector<32x32xf32>, vector<16x32xf32> -> vector<16x32xf32>
    %121 = vector.broadcast %11 : vector<1x32xf32> to vector<16x32xf32>
    %122 = arith.addf %120, %121 : vector<16x32xf32>
    %cst_53 = arith.constant dense<0.000000e+00> : vector<16x64xf32>
    %123 = tpu.matmul %1, %5, %cst_53 {dimension_numbers = #tpu.dot_dimension_numbers<[1], [0], [0], [1], [0, 0, 1, 1], [], []>} : vector<16x32xf32>, vector<32x64xf32>, vector<16x64xf32> -> vector<16x64xf32>
    %124 = vector.broadcast %12 : vector<1x64xf32> to vector<16x64xf32>
    %125 = arith.addf %123, %124 : vector<16x64xf32>
    %126 = vector.extract_strided_slice %125 {offsets = [0, 0], sizes = [16, 32], strides = [1, 1]} : vector<16x64xf32> to vector<16x32xf32>
    %127 = vector.extract_strided_slice %125 {offsets = [0, 32], sizes = [16, 32], strides = [1, 1]} : vector<16x64xf32> to vector<16x32xf32>
    %128 = vector.extract_strided_slice %122 {offsets = [0, 0], sizes = [8, 32], strides = [1, 1]} : vector<16x32xf32> to vector<8x32xf32>
    %129 = vector.extract_strided_slice %126 {offsets = [0, 0], sizes = [8, 32], strides = [1, 1]} : vector<16x32xf32> to vector<8x32xf32>
    %130 = vector.extract_strided_slice %128 {offsets = [0, 0], sizes = [8, 8], strides = [1, 1]} : vector<8x32xf32> to vector<8x8xf32>
    %131 = vector.extract_strided_slice %129 {offsets = [0, 0], sizes = [8, 8], strides = [1, 1]} : vector<8x32xf32> to vector<8x8xf32>
    %cst_54 = arith.constant dense<0.000000e+00> : vector<8x8xf32>
    %132 = tpu.matmul %130, %131, %cst_54 {dimension_numbers = #tpu.dot_dimension_numbers<[1], [1], [0], [0], [0, 0, 1, 0], [], []>} : vector<8x8xf32>, vector<8x8xf32>, vector<8x8xf32> -> vector<8x8xf32>
    %133 = vector.extract_strided_slice %128 {offsets = [0, 8], sizes = [8, 8], strides = [1, 1]} : vector<8x32xf32> to vector<8x8xf32>
    %134 = vector.extract_strided_slice %129 {offsets = [0, 8], sizes = [8, 8], strides = [1, 1]} : vector<8x32xf32> to vector<8x8xf32>
    %cst_55 = arith.constant dense<0.000000e+00> : vector<8x8xf32>
    %135 = tpu.matmul %133, %134, %cst_55 {dimension_numbers = #tpu.dot_dimension_numbers<[1], [1], [0], [0], [0, 0, 1, 0], [], []>} : vector<8x8xf32>, vector<8x8xf32>, vector<8x8xf32> -> vector<8x8xf32>
    %136 = vector.extract_strided_slice %128 {offsets = [0, 16], sizes = [8, 8], strides = [1, 1]} : vector<8x32xf32> to vector<8x8xf32>
    %137 = vector.extract_strided_slice %129 {offsets = [0, 16], sizes = [8, 8], strides = [1, 1]} : vector<8x32xf32> to vector<8x8xf32>
    %cst_56 = arith.constant dense<0.000000e+00> : vector<8x8xf32>
    %138 = tpu.matmul %136, %137, %cst_56 {dimension_numbers = #tpu.dot_dimension_numbers<[1], [1], [0], [0], [0, 0, 1, 0], [], []>} : vector<8x8xf32>, vector<8x8xf32>, vector<8x8xf32> -> vector<8x8xf32>
    %139 = vector.extract_strided_slice %128 {offsets = [0, 24], sizes = [8, 8], strides = [1, 1]} : vector<8x32xf32> to vector<8x8xf32>
    %140 = vector.extract_strided_slice %129 {offsets = [0, 24], sizes = [8, 8], strides = [1, 1]} : vector<8x32xf32> to vector<8x8xf32>
    %cst_57 = arith.constant dense<0.000000e+00> : vector<8x8xf32>
    %141 = tpu.matmul %139, %140, %cst_57 {dimension_numbers = #tpu.dot_dimension_numbers<[1], [1], [0], [0], [0, 0, 1, 0], [], []>} : vector<8x8xf32>, vector<8x8xf32>, vector<8x8xf32> -> vector<8x8xf32>
    %142 = vector.extract_strided_slice %122 {offsets = [8, 0], sizes = [8, 32], strides = [1, 1]} : vector<16x32xf32> to vector<8x32xf32>
    %143 = vector.extract_strided_slice %126 {offsets = [8, 0], sizes = [8, 32], strides = [1, 1]} : vector<16x32xf32> to vector<8x32xf32>
    %144 = vector.extract_strided_slice %142 {offsets = [0, 0], sizes = [8, 8], strides = [1, 1]} : vector<8x32xf32> to vector<8x8xf32>
    %145 = vector.extract_strided_slice %143 {offsets = [0, 0], sizes = [8, 8], strides = [1, 1]} : vector<8x32xf32> to vector<8x8xf32>
    %cst_58 = arith.constant dense<0.000000e+00> : vector<8x8xf32>
    %146 = tpu.matmul %144, %145, %cst_58 {dimension_numbers = #tpu.dot_dimension_numbers<[1], [1], [0], [0], [0, 0, 1, 0], [], []>} : vector<8x8xf32>, vector<8x8xf32>, vector<8x8xf32> -> vector<8x8xf32>
    %147 = vector.extract_strided_slice %142 {offsets = [0, 8], sizes = [8, 8], strides = [1, 1]} : vector<8x32xf32> to vector<8x8xf32>
    %148 = vector.extract_strided_slice %143 {offsets = [0, 8], sizes = [8, 8], strides = [1, 1]} : vector<8x32xf32> to vector<8x8xf32>
    %cst_59 = arith.constant dense<0.000000e+00> : vector<8x8xf32>
    %149 = tpu.matmul %147, %148, %cst_59 {dimension_numbers = #tpu.dot_dimension_numbers<[1], [1], [0], [0], [0, 0, 1, 0], [], []>} : vector<8x8xf32>, vector<8x8xf32>, vector<8x8xf32> -> vector<8x8xf32>
    %150 = vector.extract_strided_slice %142 {offsets = [0, 16], sizes = [8, 8], strides = [1, 1]} : vector<8x32xf32> to vector<8x8xf32>
    %151 = vector.extract_strided_slice %143 {offsets = [0, 16], sizes = [8, 8], strides = [1, 1]} : vector<8x32xf32> to vector<8x8xf32>
    %cst_60 = arith.constant dense<0.000000e+00> : vector<8x8xf32>
    %152 = tpu.matmul %150, %151, %cst_60 {dimension_numbers = #tpu.dot_dimension_numbers<[1], [1], [0], [0], [0, 0, 1, 0], [], []>} : vector<8x8xf32>, vector<8x8xf32>, vector<8x8xf32> -> vector<8x8xf32>
    %153 = vector.extract_strided_slice %142 {offsets = [0, 24], sizes = [8, 8], strides = [1, 1]} : vector<8x32xf32> to vector<8x8xf32>
    %154 = vector.extract_strided_slice %143 {offsets = [0, 24], sizes = [8, 8], strides = [1, 1]} : vector<8x32xf32> to vector<8x8xf32>
    %cst_61 = arith.constant dense<0.000000e+00> : vector<8x8xf32>
    %155 = tpu.matmul %153, %154, %cst_61 {dimension_numbers = #tpu.dot_dimension_numbers<[1], [1], [0], [0], [0, 0, 1, 0], [], []>} : vector<8x8xf32>, vector<8x8xf32>, vector<8x8xf32> -> vector<8x8xf32>
    %156 = tpu.concatenate %132, %135, %138, %141, %146, %149, %152, %155 in 0 : vector<8x8xf32>, vector<8x8xf32>, vector<8x8xf32>, vector<8x8xf32>, vector<8x8xf32>, vector<8x8xf32>, vector<8x8xf32>, vector<8x8xf32> -> vector<64x8xf32>
    %cst_62 = arith.constant 0.353553385 : f32
    %157 = vector.broadcast %cst_62 : f32 to vector<64x8xf32>
    %158 = arith.mulf %156, %157 : vector<64x8xf32>
    %cst_63 = arith.constant dense<0xFF800000> : vector<64xf32>
    %159 = vector.multi_reduction <maximumf>, %158, %cst_63 [1] : vector<64x8xf32> to vector<64xf32>
    %160 = vector.shape_cast %159 : vector<64xf32> to vector<64x1xf32>
    %161 = vector.broadcast %160 : vector<64x1xf32> to vector<64x8xf32>
    %162 = arith.subf %158, %161 : vector<64x8xf32>
    %163 = math.exp %162 : vector<64x8xf32>
    %cst_64 = arith.constant dense<0.000000e+00> : vector<64xf32>
    %164 = vector.multi_reduction <add>, %163, %cst_64 [1] : vector<64x8xf32> to vector<64xf32>
    %165 = vector.shape_cast %164 : vector<64xf32> to vector<64x1xf32>
    %166 = vector.broadcast %165 : vector<64x1xf32> to vector<64x8xf32>
    %167 = arith.divf %163, %166 : vector<64x8xf32>
    %168 = vector.extract_strided_slice %127 {offsets = [0, 0], sizes = [8, 32], strides = [1, 1]} : vector<16x32xf32> to vector<8x32xf32>
    %169 = vector.extract_strided_slice %167 {offsets = [0, 0], sizes = [8, 8], strides = [1, 1]} : vector<64x8xf32> to vector<8x8xf32>
    %170 = vector.extract_strided_slice %168 {offsets = [0, 0], sizes = [8, 8], strides = [1, 1]} : vector<8x32xf32> to vector<8x8xf32>
    %cst_65 = arith.constant dense<0.000000e+00> : vector<8x8xf32>
    %171 = tpu.matmul %169, %170, %cst_65 {dimension_numbers = #tpu.dot_dimension_numbers<[1], [0], [0], [1], [0, 0, 1, 1], [], []>} : vector<8x8xf32>, vector<8x8xf32>, vector<8x8xf32> -> vector<8x8xf32>
    %172 = vector.extract_strided_slice %167 {offsets = [8, 0], sizes = [8, 8], strides = [1, 1]} : vector<64x8xf32> to vector<8x8xf32>
    %173 = vector.extract_strided_slice %168 {offsets = [0, 8], sizes = [8, 8], strides = [1, 1]} : vector<8x32xf32> to vector<8x8xf32>
    %cst_66 = arith.constant dense<0.000000e+00> : vector<8x8xf32>
    %174 = tpu.matmul %172, %173, %cst_66 {dimension_numbers = #tpu.dot_dimension_numbers<[1], [0], [0], [1], [0, 0, 1, 1], [], []>} : vector<8x8xf32>, vector<8x8xf32>, vector<8x8xf32> -> vector<8x8xf32>
    %175 = vector.extract_strided_slice %167 {offsets = [16, 0], sizes = [8, 8], strides = [1, 1]} : vector<64x8xf32> to vector<8x8xf32>
    %176 = vector.extract_strided_slice %168 {offsets = [0, 16], sizes = [8, 8], strides = [1, 1]} : vector<8x32xf32> to vector<8x8xf32>
    %cst_67 = arith.constant dense<0.000000e+00> : vector<8x8xf32>
    %177 = tpu.matmul %175, %176, %cst_67 {dimension_numbers = #tpu.dot_dimension_numbers<[1], [0], [0], [1], [0, 0, 1, 1], [], []>} : vector<8x8xf32>, vector<8x8xf32>, vector<8x8xf32> -> vector<8x8xf32>
    %178 = vector.extract_strided_slice %167 {offsets = [24, 0], sizes = [8, 8], strides = [1, 1]} : vector<64x8xf32> to vector<8x8xf32>
    %179 = vector.extract_strided_slice %168 {offsets = [0, 24], sizes = [8, 8], strides = [1, 1]} : vector<8x32xf32> to vector<8x8xf32>
    %cst_68 = arith.constant dense<0.000000e+00> : vector<8x8xf32>
    %180 = tpu.matmul %178, %179, %cst_68 {dimension_numbers = #tpu.dot_dimension_numbers<[1], [0], [0], [1], [0, 0, 1, 1], [], []>} : vector<8x8xf32>, vector<8x8xf32>, vector<8x8xf32> -> vector<8x8xf32>
    %181 = tpu.concatenate %171, %174, %177, %180 in 1 : vector<8x8xf32>, vector<8x8xf32>, vector<8x8xf32>, vector<8x8xf32> -> vector<8x32xf32>
    %182 = tpu.concatenate %169, %172, %175, %178 in 1 : vector<8x8xf32>, vector<8x8xf32>, vector<8x8xf32>, vector<8x8xf32> -> vector<8x32xf32>
    %183 = vector.extract_strided_slice %127 {offsets = [8, 0], sizes = [8, 32], strides = [1, 1]} : vector<16x32xf32> to vector<8x32xf32>
    %184 = vector.extract_strided_slice %167 {offsets = [32, 0], sizes = [8, 8], strides = [1, 1]} : vector<64x8xf32> to vector<8x8xf32>
    %185 = vector.extract_strided_slice %183 {offsets = [0, 0], sizes = [8, 8], strides = [1, 1]} : vector<8x32xf32> to vector<8x8xf32>
    %cst_69 = arith.constant dense<0.000000e+00> : vector<8x8xf32>
    %186 = tpu.matmul %184, %185, %cst_69 {dimension_numbers = #tpu.dot_dimension_numbers<[1], [0], [0], [1], [0, 0, 1, 1], [], []>} : vector<8x8xf32>, vector<8x8xf32>, vector<8x8xf32> -> vector<8x8xf32>
    %187 = vector.extract_strided_slice %167 {offsets = [40, 0], sizes = [8, 8], strides = [1, 1]} : vector<64x8xf32> to vector<8x8xf32>
    %188 = vector.extract_strided_slice %183 {offsets = [0, 8], sizes = [8, 8], strides = [1, 1]} : vector<8x32xf32> to vector<8x8xf32>
    %cst_70 = arith.constant dense<0.000000e+00> : vector<8x8xf32>
    %189 = tpu.matmul %187, %188, %cst_70 {dimension_numbers = #tpu.dot_dimension_numbers<[1], [0], [0], [1], [0, 0, 1, 1], [], []>} : vector<8x8xf32>, vector<8x8xf32>, vector<8x8xf32> -> vector<8x8xf32>
    %190 = vector.extract_strided_slice %167 {offsets = [48, 0], sizes = [8, 8], strides = [1, 1]} : vector<64x8xf32> to vector<8x8xf32>
    %191 = vector.extract_strided_slice %183 {offsets = [0, 16], sizes = [8, 8], strides = [1, 1]} : vector<8x32xf32> to vector<8x8xf32>
    %cst_71 = arith.constant dense<0.000000e+00> : vector<8x8xf32>
    %192 = tpu.matmul %190, %191, %cst_71 {dimension_numbers = #tpu.dot_dimension_numbers<[1], [0], [0], [1], [0, 0, 1, 1], [], []>} : vector<8x8xf32>, vector<8x8xf32>, vector<8x8xf32> -> vector<8x8xf32>
    %193 = vector.extract_strided_slice %167 {offsets = [56, 0], sizes = [8, 8], strides = [1, 1]} : vector<64x8xf32> to vector<8x8xf32>
    %194 = vector.extract_strided_slice %183 {offsets = [0, 24], sizes = [8, 8], strides = [1, 1]} : vector<8x32xf32> to vector<8x8xf32>
    %cst_72 = arith.constant dense<0.000000e+00> : vector<8x8xf32>
    %195 = tpu.matmul %193, %194, %cst_72 {dimension_numbers = #tpu.dot_dimension_numbers<[1], [0], [0], [1], [0, 0, 1, 1], [], []>} : vector<8x8xf32>, vector<8x8xf32>, vector<8x8xf32> -> vector<8x8xf32>
    %196 = tpu.concatenate %186, %189, %192, %195 in 1 : vector<8x8xf32>, vector<8x8xf32>, vector<8x8xf32>, vector<8x8xf32> -> vector<8x32xf32>
    %197 = tpu.concatenate %184, %187, %190, %193 in 1 : vector<8x8xf32>, vector<8x8xf32>, vector<8x8xf32>, vector<8x8xf32> -> vector<8x32xf32>
    %198 = tpu.concatenate %181, %196 in 0 : vector<8x32xf32>, vector<8x32xf32> -> vector<16x32xf32>
    %cst_73 = arith.constant dense<0.000000e+00> : vector<16x32xf32>
    %199 = tpu.matmul %198, %6, %cst_73 {dimension_numbers = #tpu.dot_dimension_numbers<[1], [0], [0], [1], [0, 0, 1, 1], [], []>} : vector<16x32xf32>, vector<32x32xf32>, vector<16x32xf32> -> vector<16x32xf32>
    %200 = vector.broadcast %13 : vector<1x32xf32> to vector<16x32xf32>
    %201 = arith.addf %199, %200 : vector<16x32xf32>
    %202 = tpu.concatenate %182, %197 in 0 : vector<8x32xf32>, vector<8x32xf32> -> vector<16x32xf32>
    %203 = arith.addf %119, %201 : vector<16x32xf32>
    %cst_74 = arith.constant dense<0.000000e+00> : vector<16xf32>
    %204 = vector.multi_reduction <add>, %203, %cst_74 [1] : vector<16x32xf32> to vector<16xf32>
    %205 = vector.shape_cast %204 : vector<16xf32> to vector<16x1xf32>
    %cst_75 = arith.constant 3.200000e+01 : f32
    %206 = vector.broadcast %cst_75 : f32 to vector<16x1xf32>
    %207 = arith.divf %205, %206 : vector<16x1xf32>
    %208 = vector.broadcast %207 : vector<16x1xf32> to vector<16x32xf32>
    %209 = arith.subf %203, %208 : vector<16x32xf32>
    %210 = arith.mulf %209, %209 : vector<16x32xf32>
    %cst_76 = arith.constant dense<0.000000e+00> : vector<16xf32>
    %211 = vector.multi_reduction <add>, %210, %cst_76 [1] : vector<16x32xf32> to vector<16xf32>
    %212 = vector.shape_cast %211 : vector<16xf32> to vector<16x1xf32>
    %cst_77 = arith.constant 3.200000e+01 : f32
    %213 = vector.broadcast %cst_77 : f32 to vector<16x1xf32>
    %214 = arith.divf %212, %213 : vector<16x1xf32>
    %215 = vector.broadcast %207 : vector<16x1xf32> to vector<16x32xf32>
    %216 = arith.subf %203, %215 : vector<16x32xf32>
    %cst_78 = arith.constant 9.99999974E-6 : f32
    %217 = vector.broadcast %cst_78 : f32 to vector<16x1xf32>
    %218 = arith.addf %214, %217 : vector<16x1xf32>
    %219 = math.rsqrt %218 : vector<16x1xf32>
    %220 = vector.broadcast %219 : vector<16x1xf32> to vector<16x32xf32>
    %221 = arith.mulf %216, %220 : vector<16x32xf32>
    %222 = vector.broadcast %16 : vector<1x32xf32> to vector<16x32xf32>
    %223 = arith.mulf %221, %222 : vector<16x32xf32>
    %224 = vector.broadcast %17 : vector<1x32xf32> to vector<16x32xf32>
    %225 = arith.addf %223, %224 : vector<16x32xf32>
    %cst_79 = arith.constant dense<0.000000e+00> : vector<16x64xf32>
    %226 = tpu.matmul %225, %7, %cst_79 {dimension_numbers = #tpu.dot_dimension_numbers<[1], [0], [0], [1], [0, 0, 1, 1], [], []>} : vector<16x32xf32>, vector<32x64xf32>, vector<16x64xf32> -> vector<16x64xf32>
    %227 = vector.broadcast %14 : vector<1x64xf32> to vector<16x64xf32>
    %228 = arith.addf %226, %227 : vector<16x64xf32>
    %cst_80 = arith.constant 0.000000e+00 : f32
    %229 = vector.broadcast %cst_80 : f32 to vector<16x64xf32>
    %230 = arith.maximumf %228, %229 : vector<16x64xf32>
    %cst_81 = arith.constant dense<0.000000e+00> : vector<16x32xf32>
    %231 = tpu.matmul %230, %8, %cst_81 {dimension_numbers = #tpu.dot_dimension_numbers<[1], [0], [0], [1], [0, 0, 1, 1], [], []>} : vector<16x64xf32>, vector<64x32xf32>, vector<16x32xf32> -> vector<16x32xf32>
    %232 = vector.broadcast %15 : vector<1x32xf32> to vector<16x32xf32>
    %233 = arith.addf %231, %232 : vector<16x32xf32>
    %234 = arith.addf %225, %233 : vector<16x32xf32>
    %cst_82 = arith.constant dense<0.000000e+00> : vector<16xf32>
    %235 = vector.multi_reduction <add>, %234, %cst_82 [1] : vector<16x32xf32> to vector<16xf32>
    %236 = vector.shape_cast %235 : vector<16xf32> to vector<16x1xf32>
    %cst_83 = arith.constant 3.200000e+01 : f32
    %237 = vector.broadcast %cst_83 : f32 to vector<16x1xf32>
    %238 = arith.divf %236, %237 : vector<16x1xf32>
    %239 = vector.broadcast %238 : vector<16x1xf32> to vector<16x32xf32>
    %240 = arith.subf %234, %239 : vector<16x32xf32>
    %241 = arith.mulf %240, %240 : vector<16x32xf32>
    %cst_84 = arith.constant dense<0.000000e+00> : vector<16xf32>
    %242 = vector.multi_reduction <add>, %241, %cst_84 [1] : vector<16x32xf32> to vector<16xf32>
    %243 = vector.shape_cast %242 : vector<16xf32> to vector<16x1xf32>
    %cst_85 = arith.constant 3.200000e+01 : f32
    %244 = vector.broadcast %cst_85 : f32 to vector<16x1xf32>
    %245 = arith.divf %243, %244 : vector<16x1xf32>
    %246 = vector.broadcast %238 : vector<16x1xf32> to vector<16x32xf32>
    %247 = arith.subf %234, %246 : vector<16x32xf32>
    %cst_86 = arith.constant 9.99999974E-6 : f32
    %248 = vector.broadcast %cst_86 : f32 to vector<16x1xf32>
    %249 = arith.addf %245, %248 : vector<16x1xf32>
    %250 = math.rsqrt %249 : vector<16x1xf32>
    %251 = vector.broadcast %250 : vector<16x1xf32> to vector<16x32xf32>
    %252 = arith.mulf %247, %251 : vector<16x32xf32>
    %253 = vector.broadcast %16 : vector<1x32xf32> to vector<16x32xf32>
    %254 = arith.mulf %252, %253 : vector<16x32xf32>
    %255 = vector.broadcast %17 : vector<1x32xf32> to vector<16x32xf32>
    %256 = arith.addf %254, %255 : vector<16x32xf32>
    %257 = tpu.concatenate %256, %202 in 1 : vector<16x32xf32>, vector<16x32xf32> -> vector<16x64xf32>
    %c0_87 = arith.constant 0 : index
    %c0_88 = arith.constant 0 : index
    %258 = vector.load %arg5[%c0_87, %c0_88] : memref<16x64xf32, #tpu.memory_space<vmem>>, vector<16x64xf32>
    tpu.vector_store %arg5[%c0_87, %c0_88], %257 {strides = array<i32>} : memref<16x64xf32, #tpu.memory_space<vmem>>, vector<16x64xf32>,
    return
  }
  func.func @transform_0(%arg0: i32) -> (i32, i32) {
    %c0_i32 = arith.constant 0 : i32
    %c0_i32_0 = arith.constant 0 : i32
    %c0_i32_1 = arith.constant 0 : i32
    return %c0_i32, %c0_i32_0 : i32, i32
  }
  func.func @transform_1(%arg0: i32) -> (i32, i32) {
    %c0_i32 = arith.constant 0 : i32
    %c0_i32_0 = arith.constant 0 : i32
    %c0_i32_1 = arith.constant 0 : i32
    return %c0_i32, %c0_i32_0 : i32, i32
  }
  func.func @transform_2(%arg0: i32) -> (i32, i32) {
    %c0_i32 = arith.constant 0 : i32
    %c0_i32_0 = arith.constant 0 : i32
    %c0_i32_1 = arith.constant 0 : i32
    return %c0_i32, %c0_i32_0 : i32, i32
  }
  func.func @transform_3(%arg0: i32) -> (i32, i32) {
    %c0_i32 = arith.constant 0 : i32
    %c0_i32_0 = arith.constant 0 : i32
    %c0_i32_1 = arith.constant 0 : i32
    return %c0_i32, %c0_i32_0 : i32, i32
  }
  func.func @transform_4(%arg0: i32) -> (i32, i32) {
    %c0_i32 = arith.constant 0 : i32
    %c0_i32_0 = arith.constant 0 : i32
    %c0_i32_1 = arith.constant 0 : i32
    return %c0_i32, %c0_i32_0 : i32, i32
  }
}

</mosaic_0001>

<llo_original>
// kernel: tpu_custom_call.1
$region0: #{tpu_custom_call.1}
  #allocation0 [shape = 'u32[]', space=smem, size = 0x4, offset = 0x4, fixed_abs, tag = 'smem constant byte address 0x4 - core index']
  #allocation1 [shape = 'u32[72,128]{1,0:T(1,128)}', space=vmem, size = 0x9000, scoped, tag = 'internal scratch']
  %s0 = inlined_call_operand.hbm [shape: f32[16,32], index: 0, kind: input, shape index: {}]
  %s1 = inlined_call_operand.hbm [shape: f32[16,32], index: 1, kind: input, shape index: {}]
  %s2 = inlined_call_operand.hbm [shape: f32[64,896], index: 2, kind: input, shape index: {}]
  %s3 = inlined_call_operand.hbm [shape: f32[1,1152], index: 3, kind: input, shape index: {}]
  %s4 = inlined_call_operand.hbm [shape: f32[16,64], index: 4, kind: output, shape index: {}]
  %s5 = sld [smem:[#allocation0]]
  $region42: #{tpu_custom_call.1} parent=0
    _
  %s7 = ssub.s32 1, %s5
  %s8 = scalar_select 0, %s7, %s5
  $region1: #{tpu_custom_call.1} parent=0
    #allocation2 [shape = 'u8[8192]{0}', space=vmem, size = 0x2000, scoped, tag = 'input window, operand 0, single buffered']
    #allocation3 [shape = 's32[1]{0}', space=sflag, size = 0x4, scoped, tag = 'scoped memory for tpu_custom_call.1']
    #allocation4 [shape = 's32[1]{0}', space=sflag, size = 0x4, scoped, tag = 'scoped memory for tpu_custom_call.1']
    #allocation5 [shape = 'u8[8192]{0}', space=vmem, size = 0x2000, scoped, tag = 'input window, operand 1, single buffered']
    #allocation6 [shape = 's32[1]{0}', space=sflag, size = 0x4, scoped, tag = 'scoped memory for tpu_custom_call.1']
    #allocation7 [shape = 'u8[229376]{0}', space=vmem, size = 0x38000, scoped, tag = 'input window, operand 2, single buffered']
    #allocation8 [shape = 'u8[4608]{0}', space=vmem, size = 0x1400, scoped, tag = 'input window, operand 3, single buffered']
    #allocation9 [shape = 's32[1]{0}', space=sflag, size = 0x4, scoped, tag = 'scoped memory for tpu_custom_call.1']
    #allocation10 [shape = 'u8[8192]{0}', space=vmem, size = 0x2000, scoped, tag = 'output window, operand 0, single buffered']
    %9 = vsyncpa [#allocation3], 0
    %10 = vsyncpa [#allocation6], 0
    %11 = vsyncpa [#allocation9], 0
    %12 = vsyncpa [#allocation4], 0
    // Predicated region
    $region2: #{tpu_custom_call.1} parent=1 // pred_check
      _
    $region3: #{tpu_custom_call.1} parent=1 // pred_check_branch
      %14 = sbr.rel (0) target = $region5
    $region4: #{tpu_custom_call.1} parent=1 // pred_region
      %16 = vsyncadd [#allocation3], 0
      %s17 = sshll.u32 %s0, 4
      %s18 = int_to_ptr.hbm [resolvable:$true] %s17
      %s19 = sshll.u32 [#allocation2], 4
      %s20 = int_to_ptr.vmem [resolvable:$true] %s19
      %25 = dma.hbm_to_vmem [thread:$0]  %s18, 256, %s20, [#allocation3], 128, 128, 8
    $region5: #{tpu_custom_call.1} parent=1 // pred_fallthru
      _
    // Predicated region
    $region6: #{tpu_custom_call.1} parent=1 // pred_check
      _
    $region7: #{tpu_custom_call.1} parent=1 // pred_check_branch
      %27 = sbr.rel (0) target = $region9
    $region8: #{tpu_custom_call.1} parent=1 // pred_region
      %29 = vsyncadd [#allocation6], 0
      %s30 = sshll.u32 %s1, 4
      %s31 = int_to_ptr.hbm [resolvable:$true] %s30
      %s32 = sshll.u32 [#allocation5], 4
      %s33 = int_to_ptr.vmem [resolvable:$true] %s32
      %38 = dma.hbm_to_vmem [thread:$0]  %s31, 256, %s33, [#allocation6], 128, 128, 8
    $region9: #{tpu_custom_call.1} parent=1 // pred_fallthru
      _
    // Predicated region
    $region10: #{tpu_custom_call.1} parent=1 // pred_check
      _
    $region11: #{tpu_custom_call.1} parent=1 // pred_check_branch
      %40 = sbr.rel (0) target = $region13
    $region12: #{tpu_custom_call.1} parent=1 // pred_region
      %42 = vsyncadd [#allocation6], 0
      %s43 = sshll.u32 %s2, 4
      %s44 = int_to_ptr.hbm [resolvable:$true] %s43
      %s45 = sshll.u32 [#allocation7], 4
      %s46 = int_to_ptr.vmem [resolvable:$true] %s45
      %51 = dma.hbm_to_vmem [thread:$0]  %s44, 7168, %s46, [#allocation6], 896, 896, 56
    $region13: #{tpu_custom_call.1} parent=1 // pred_fallthru
      _
    // Predicated region
    $region14: #{tpu_custom_call.1} parent=1 // pred_check
      _
    $region15: #{tpu_custom_call.1} parent=1 // pred_check_branch
      %53 = sbr.rel (0) target = $region17
    $region16: #{tpu_custom_call.1} parent=1 // pred_region
      %55 = vsyncadd [#allocation9], 0
      %s57 = sshll.u32 %s3, 4
      %s58 = int_to_ptr.hbm [resolvable:$true] %s57
      %s59 = sshll.u32 [#allocation8], 4
      %s60 = int_to_ptr.vmem [resolvable:$true] %s59
      %62 = dma.hbm_to_vmem [thread:$0]  %s58, 144, %s60, [#allocation9]
    $region17: #{tpu_custom_call.1} parent=1 // pred_fallthru
      _
    // Predicated region
    $region18: #{tpu_custom_call.1} parent=1 // pred_check
      _
    $region19: #{tpu_custom_call.1} parent=1 // pred_check_branch
      %64 = sbr.rel (0) target = $region21
    $region20: #{tpu_custom_call.1} parent=1 // pred_region
      %66 = dma.done [#allocation3], 256
    $region21: #{tpu_custom_call.1} parent=1 // pred_fallthru
      _
    // Predicated region
    $region22: #{tpu_custom_call.1} parent=1 // pred_check
      _
    $region23: #{tpu_custom_call.1} parent=1 // pred_check_branch
      %68 = sbr.rel (0) target = $region25
    $region24: #{tpu_custom_call.1} parent=1 // pred_region
      %70 = dma.done [#allocation6], 256
    $region25: #{tpu_custom_call.1} parent=1 // pred_fallthru
      _
    // Predicated region
    $region26: #{tpu_custom_call.1} parent=1 // pred_check
      _
    $region27: #{tpu_custom_call.1} parent=1 // pred_check_branch
      %72 = sbr.rel (0) target = $region29
    $region28: #{tpu_custom_call.1} parent=1 // pred_region
      %74 = dma.done [#allocation6], 7168
    $region29: #{tpu_custom_call.1} parent=1 // pred_fallthru
      _
    // Predicated region
    $region30: #{tpu_custom_call.1} parent=1 // pred_check
      _
    $region31: #{tpu_custom_call.1} parent=1 // pred_check_branch
      %76 = sbr.rel (0) target = $region33
    $region32: #{tpu_custom_call.1} parent=1 // pred_region
      %78 = dma.done [#allocation9], 144
    $region33: #{tpu_custom_call.1} parent=1 // pred_fallthru
      _
    %v79 = vld [vmem:[#allocation2] sm:$0xff]
    %v80 = vld [vmem:[#allocation2 + $0x8] sm:$0xff]
    %v81 = vld [vmem:[#allocation5] sm:$0xff]
    %v82 = vld [vmem:[#allocation5 + $0x8] sm:$0xff]
    %v83 = vld [vmem:[#allocation7] sm:$0xff]
    %v84 = vld [vmem:[#allocation7 + $0x38] sm:$0xff]
    %v85 = vld [vmem:[#allocation7 + $0x70] sm:$0xff]
    %v86 = vld [vmem:[#allocation7 + $0xa8] sm:$0xff]
    %v87 = vld [vmem:[#allocation7 + $0x8] sm:$0xff]
    %v88 = vld [vmem:[#allocation7 + $0x40] sm:$0xff]
    %v89 = vld [vmem:[#allocation7 + $0x78] sm:$0xff]
    %v90 = vld [vmem:[#allocation7 + $0xb0] sm:$0xff]
    %v91 = vld [vmem:[#allocation7 + $0x10] sm:$0xff]
    %v92 = vld [vmem:[#allocation7 + $0x48] sm:$0xff]
    %v93 = vld [vmem:[#allocation7 + $0x80] sm:$0xff]
    %v94 = vld [vmem:[#allocation7 + $0xb8] sm:$0xff]
    %v95 = vld [vmem:[#allocation7 + $0x18] sm:$0xff]
    %v96 = vld [vmem:[#allocation7 + $0x50] sm:$0xff]
    %v97 = vld [vmem:[#allocation7 + $0x88] sm:$0xff]
    %v98 = vld [vmem:[#allocation7 + $0xc0] sm:$0xff]
    %v99 = vld [vmem:[#allocation7 + $0x20] sm:$0xff]
    %v100 = vld [vmem:[#allocation7 + $0x58] sm:$0xff]
    %v101 = vld [vmem:[#allocation7 + $0x90] sm:$0xff]
    %v102 = vld [vmem:[#allocation7 + $0xc8] sm:$0xff]
    %v103 = vld [vmem:[#allocation7 + $0x28] sm:$0xff]
    %v104 = vld [vmem:[#allocation7 + $0x60] sm:$0xff]
    %v105 = vld [vmem:[#allocation7 + $0x98] sm:$0xff]
    %v106 = vld [vmem:[#allocation7 + $0xd0] sm:$0xff]
    %v107 = vld [vmem:[#allocation7 + $0x30] sm:$0xff]
    %v108 = vld [vmem:[#allocation7 + $0x68] sm:$0xff]
    %v109 = vld [vmem:[#allocation7 + $0xa0] sm:$0xff]
    %v110 = vld [vmem:[#allocation7 + $0xd8] sm:$0xff]
    %v111 = vld [vmem:[#allocation7 + $0x110] sm:$0xff]
    %v112 = vld [vmem:[#allocation7 + $0x148] sm:$0xff]
    %v113 = vld [vmem:[#allocation7 + $0x180] sm:$0xff]
    %v114 = vld [vmem:[#allocation7 + $0x1b8] sm:$0xff]
    %v115 = vld [vmem:[#allocation8] sm:$0x1]
    %v116 = vld [vmem:[#allocation8 + $0x1] sm:$0x1]
    %v117 = vld [vmem:[#allocation8 + $0x2] sm:$0x1]
    %v118 = vld [vmem:[#allocation8 + $0x3] sm:$0x1]
    %v119 = vld [vmem:[#allocation8 + $0x4] sm:$0x1]
    %v120 = vld [vmem:[#allocation8 + $0x5] sm:$0x1]
    %v121 = vld [vmem:[#allocation8 + $0x6] sm:$0x1]
    %v122 = vld [vmem:[#allocation8 + $0x7] sm:$0x1]
    %v123 = vld [vmem:[#allocation8 + $0x8] sm:$0x1]
    %v125 = vperm.slane %v115, 0
    %vm127 = vcmask 261120
    %v129 = vsel %vm127, %v79, 0
    %v132 = vsel %vm127, %v80, 0
    %134 = vmatpush.msra.mxu0 0.0
    %135 = vmatpush.msra.mxu0 0.0
    %136 = vmatpush.msra.mxu0 0.0
    %137 = vmatpush.msra.mxu0 0.0
    %138 = vmatpush.msra.mxu0 0.0
    %139 = vmatpush.msra.mxu0 0.0
    %140 = vmatpush.msra.mxu0 0.0
    %141 = vmatpush.msra.mxu0 0.0
    %142 = vmatpush.msra.mxu0 0.0
    %143 = vmatpush.msra.mxu0 0.0
    %144 = vmatpush.msra.mxu0 0.0
    %145 = vmatpush.msra.mxu0 0.0
    %146 = vmatpush.msra.mxu0 %v86
    %147 = vmatpush.msra.mxu0 %v85
    %148 = vmatpush.msra.mxu0 %v84
    %149 = vmatpush.msra.mxu0 %v83
    %150 = vmatmul.f32.gmra.mxu0 %v129
    %v151 = vpop.f32.mrf.mxu0
    %v152 = vadd.f32 %v125, %v151
    %153 = vmatmul.f32.gmra.mxu0 %v132
    %v154 = vpop.f32.mrf.mxu0
    %v155 = vadd.f32 %v125, %v154
    %156 = vdwg.mxu0
    %158 = vrot.lane.b32.xlu0 %v152, 96
    %v159 = vpop.permute.xlu0 %158
    %vm160 = vcmask 64512
    %v161 = vsel %vm160, %v152, 0
    %v163 = vsel %vm160, %v159, 0
    %165 = vmatpush.xpose.msra.mxu0 0.0
    %166 = vmatpush.xpose.msra.mxu0 0.0
    %167 = vmatpush.xpose.msra.mxu0 0.0
    %168 = vmatpush.xpose.msra.mxu0 0.0
    %169 = vmatpush.xpose.msra.mxu0 0.0
    %170 = vmatpush.xpose.msra.mxu0 0.0
    %171 = vmatpush.xpose.msra.mxu0 0.0
    %172 = vmatpush.xpose.msra.mxu0 0.0
    %173 = vmatpush.xpose.msra.mxu0 0.0
    %174 = vmatpush.xpose.msra.mxu0 0.0
    %175 = vmatpush.xpose.msra.mxu0 0.0
    %176 = vmatpush.xpose.msra.mxu0 0.0
    %177 = vmatpush.xpose.msra.mxu0 0.0
    %178 = vmatpush.xpose.msra.mxu0 0.0
    %179 = vmatpush.xpose.msra.mxu0 0.0
    %180 = vmatpush.xpose.msra.mxu0 %v163
    %181 = vmatmul.f32.gmra.mxu0 %v161
    %v182 = vpop.f32.mrf.mxu0
    %v183 = vadd.f32 0.0, %v182
    %184 = vdwg.mxu0
    %185 = vrot.lane.b32.xlu0 %v152, 120
    %v186 = vpop.permute.xlu0 %185
    %187 = vrot.lane.b32.xlu0 %v152, 88
    %v188 = vpop.permute.xlu0 %187
    %v189 = vsel %vm160, %v186, 0
    %v191 = vsel %vm160, %v188, 0
    %193 = vmatpush.xpose.msra.mxu0 0.0
    %194 = vmatpush.xpose.msra.mxu0 0.0
    %195 = vmatpush.xpose.msra.mxu0 0.0
    %196 = vmatpush.xpose.msra.mxu0 0.0
    %197 = vmatpush.xpose.msra.mxu0 0.0
    %198 = vmatpush.xpose.msra.mxu0 0.0
    %199 = vmatpush.xpose.msra.mxu0 0.0
    %200 = vmatpush.xpose.msra.mxu0 0.0
    %201 = vmatpush.xpose.msra.mxu0 0.0
    %202 = vmatpush.xpose.msra.mxu0 0.0
    %203 = vmatpush.xpose.msra.mxu0 0.0
    %204 = vmatpush.xpose.msra.mxu0 0.0
    %205 = vmatpush.xpose.msra.mxu0 0.0
    %206 = vmatpush.xpose.msra.mxu0 0.0
    %207 = vmatpush.xpose.msra.mxu0 0.0
    %208 = vmatpush.xpose.msra.mxu0 %v191
    %209 = vmatmul.f32.gmra.mxu0 %v189
    %v210 = vpop.f32.mrf.mxu0
    %v211 = vadd.f32 0.0, %v210
    %212 = vdwg.mxu0
    %213 = vrot.lane.b32.xlu0 %v152, 112
    %v214 = vpop.permute.xlu0 %213
    %215 = vrot.lane.b32.xlu0 %v152, 80
    %v216 = vpop.permute.xlu0 %215
    %v217 = vsel %vm160, %v214, 0
    %v219 = vsel %vm160, %v216, 0
    %221 = vmatpush.xpose.msra.mxu0 0.0
    %222 = vmatpush.xpose.msra.mxu0 0.0
    %223 = vmatpush.xpose.msra.mxu0 0.0
    %224 = vmatpush.xpose.msra.mxu0 0.0
    %225 = vmatpush.xpose.msra.mxu0 0.0
    %226 = vmatpush.xpose.msra.mxu0 0.0
    %227 = vmatpush.xpose.msra.mxu0 0.0
    %228 = vmatpush.xpose.msra.mxu0 0.0
    %229 = vmatpush.xpose.msra.mxu0 0.0
    %230 = vmatpush.xpose.msra.mxu0 0.0
    %231 = vmatpush.xpose.msra.mxu0 0.0
    %232 = vmatpush.xpose.msra.mxu0 0.0
    %233 = vmatpush.xpose.msra.mxu0 0.0
    %234 = vmatpush.xpose.msra.mxu0 0.0
    %235 = vmatpush.xpose.msra.mxu0 0.0
    %236 = vmatpush.xpose.msra.mxu0 %v219
    %237 = vmatmul.f32.gmra.mxu0 %v217
    %v238 = vpop.f32.mrf.mxu0
    %v239 = vadd.f32 0.0, %v238
    %240 = vdwg.mxu0
    %241 = vrot.lane.b32.xlu0 %v152, 104
    %v242 = vpop.permute.xlu0 %241
    %243 = vrot.lane.b32.xlu0 %v152, 72
    %v244 = vpop.permute.xlu0 %243
    %v245 = vsel %vm160, %v242, 0
    %v247 = vsel %vm160, %v244, 0
    %249 = vmatpush.xpose.msra.mxu0 0.0
    %250 = vmatpush.xpose.msra.mxu0 0.0
    %251 = vmatpush.xpose.msra.mxu0 0.0
    %252 = vmatpush.xpose.msra.mxu0 0.0
    %253 = vmatpush.xpose.msra.mxu0 0.0
    %254 = vmatpush.xpose.msra.mxu0 0.0
    %255 = vmatpush.xpose.msra.mxu0 0.0
    %256 = vmatpush.xpose.msra.mxu0 0.0
    %257 = vmatpush.xpose.msra.mxu0 0.0
    %258 = vmatpush.xpose.msra.mxu0 0.0
    %259 = vmatpush.xpose.msra.mxu0 0.0
    %260 = vmatpush.xpose.msra.mxu0 0.0
    %261 = vmatpush.xpose.msra.mxu0 0.0
    %262 = vmatpush.xpose.msra.mxu0 0.0
    %263 = vmatpush.xpose.msra.mxu0 0.0
    %264 = vmatpush.xpose.msra.mxu0 %v247
    %265 = vmatmul.f32.gmra.mxu0 %v245
    %v266 = vpop.f32.mrf.mxu0
    %v267 = vadd.f32 0.0, %v266
    %268 = vdwg.mxu0
    %270 = vrot.lane.b32.xlu0 %v155, 96
    %v271 = vpop.permute.xlu0 %270
    %v272 = vsel %vm160, %v155, 0
    %v274 = vsel %vm160, %v271, 0
    %276 = vmatpush.xpose.msra.mxu0 0.0
    %277 = vmatpush.xpose.msra.mxu0 0.0
    %278 = vmatpush.xpose.msra.mxu0 0.0
    %279 = vmatpush.xpose.msra.mxu0 0.0
    %280 = vmatpush.xpose.msra.mxu0 0.0
    %281 = vmatpush.xpose.msra.mxu0 0.0
    %282 = vmatpush.xpose.msra.mxu0 0.0
    %283 = vmatpush.xpose.msra.mxu0 0.0
    %284 = vmatpush.xpose.msra.mxu0 0.0
    %285 = vmatpush.xpose.msra.mxu0 0.0
    %286 = vmatpush.xpose.msra.mxu0 0.0
    %287 = vmatpush.xpose.msra.mxu0 0.0
    %288 = vmatpush.xpose.msra.mxu0 0.0
    %289 = vmatpush.xpose.msra.mxu0 0.0
    %290 = vmatpush.xpose.msra.mxu0 0.0
    %291 = vmatpush.xpose.msra.mxu0 %v274
    %292 = vmatmul.f32.gmra.mxu0 %v272
    %v293 = vpop.f32.mrf.mxu0
    %v294 = vadd.f32 0.0, %v293
    %295 = vdwg.mxu0
    %296 = vrot.lane.b32.xlu0 %v155, 120
    %v297 = vpop.permute.xlu0 %296
    %298 = vrot.lane.b32.xlu0 %v155, 88
    %v299 = vpop.permute.xlu0 %298
    %v300 = vsel %vm160, %v297, 0
    %v302 = vsel %vm160, %v299, 0
    %304 = vmatpush.xpose.msra.mxu0 0.0
    %305 = vmatpush.xpose.msra.mxu0 0.0
    %306 = vmatpush.xpose.msra.mxu0 0.0
    %307 = vmatpush.xpose.msra.mxu0 0.0
    %308 = vmatpush.xpose.msra.mxu0 0.0
    %309 = vmatpush.xpose.msra.mxu0 0.0
    %310 = vmatpush.xpose.msra.mxu0 0.0
    %311 = vmatpush.xpose.msra.mxu0 0.0
    %312 = vmatpush.xpose.msra.mxu0 0.0
    %313 = vmatpush.xpose.msra.mxu0 0.0
    %314 = vmatpush.xpose.msra.mxu0 0.0
    %315 = vmatpush.xpose.msra.mxu0 0.0
    %316 = vmatpush.xpose.msra.mxu0 0.0
    %317 = vmatpush.xpose.msra.mxu0 0.0
    %318 = vmatpush.xpose.msra.mxu0 0.0
    %319 = vmatpush.xpose.msra.mxu0 %v302
    %320 = vmatmul.f32.gmra.mxu0 %v300
    %v321 = vpop.f32.mrf.mxu0
    %v322 = vadd.f32 0.0, %v321
    %323 = vdwg.mxu0
    %324 = vrot.lane.b32.xlu0 %v155, 112
    %v325 = vpop.permute.xlu0 %324
    %326 = vrot.lane.b32.xlu0 %v155, 80
    %v327 = vpop.permute.xlu0 %326
    %v328 = vsel %vm160, %v325, 0
    %v330 = vsel %vm160, %v327, 0
    %332 = vmatpush.xpose.msra.mxu0 0.0
    %333 = vmatpush.xpose.msra.mxu0 0.0
    %334 = vmatpush.xpose.msra.mxu0 0.0
    %335 = vmatpush.xpose.msra.mxu0 0.0
    %336 = vmatpush.xpose.msra.mxu0 0.0
    %337 = vmatpush.xpose.msra.mxu0 0.0
    %338 = vmatpush.xpose.msra.mxu0 0.0
    %339 = vmatpush.xpose.msra.mxu0 0.0
    %340 = vmatpush.xpose.msra.mxu0 0.0
    %341 = vmatpush.xpose.msra.mxu0 0.0
    %342 = vmatpush.xpose.msra.mxu0 0.0
    %343 = vmatpush.xpose.msra.mxu0 0.0
    %344 = vmatpush.xpose.msra.mxu0 0.0
    %345 = vmatpush.xpose.msra.mxu0 0.0
    %346 = vmatpush.xpose.msra.mxu0 0.0
    %347 = vmatpush.xpose.msra.mxu0 %v330
    %348 = vmatmul.f32.gmra.mxu0 %v328
    %v349 = vpop.f32.mrf.mxu0
    %v350 = vadd.f32 0.0, %v349
    %351 = vdwg.mxu0
    %352 = vrot.lane.b32.xlu0 %v155, 104
    %v353 = vpop.permute.xlu0 %352
    %354 = vrot.lane.b32.xlu0 %v155, 72
    %v355 = vpop.permute.xlu0 %354
    %v356 = vsel %vm160, %v353, 0
    %v358 = vsel %vm160, %v355, 0
    %360 = vmatpush.xpose.msra.mxu0 0.0
    %361 = vmatpush.xpose.msra.mxu0 0.0
    %362 = vmatpush.xpose.msra.mxu0 0.0
    %363 = vmatpush.xpose.msra.mxu0 0.0
    %364 = vmatpush.xpose.msra.mxu0 0.0
    %365 = vmatpush.xpose.msra.mxu0 0.0
    %366 = vmatpush.xpose.msra.mxu0 0.0
    %367 = vmatpush.xpose.msra.mxu0 0.0
    %368 = vmatpush.xpose.msra.mxu0 0.0
    %369 = vmatpush.xpose.msra.mxu0 0.0
    %370 = vmatpush.xpose.msra.mxu0 0.0
    %371 = vmatpush.xpose.msra.mxu0 0.0
    %372 = vmatpush.xpose.msra.mxu0 0.0
    %373 = vmatpush.xpose.msra.mxu0 0.0
    %374 = vmatpush.xpose.msra.mxu0 0.0
    %375 = vmatpush.xpose.msra.mxu0 %v358
    %376 = vmatmul.f32.gmra.mxu0 %v356
    %v377 = vpop.f32.mrf.mxu0
    %v378 = vadd.f32 0.0, %v377
    %379 = vdwg.mxu0
    %v380 = vmul.f32 %v183, 0.35355338
    %v381 = vmul.f32 %v211, 0.35355338
    %v382 = vmul.f32 %v239, 0.35355338
    %v383 = vmul.f32 %v267, 0.35355338
    %v384 = vmul.f32 %v294, 0.35355338
    %v385 = vmul.f32 %v322, 0.35355338
    %v386 = vmul.f32 %v350, 0.35355338
    %v387 = vmul.f32 %v378, 0.35355338
    %v388 = vsel %vm160, %v380, -inf
    %389 = vmax.xlane.f32.xlu0 %v388
    %v390 = vpop.xlane.xlu0 %389
    %v391 = vsel %vm160, %v381, -inf
    %392 = vmax.xlane.f32.xlu0 %v391
    %v393 = vpop.xlane.xlu0 %392
    %v394 = vsel %vm160, %v382, -inf
    %395 = vmax.xlane.f32.xlu0 %v394
    %v396 = vpop.xlane.xlu0 %395
    %v397 = vsel %vm160, %v383, -inf
    %398 = vmax.xlane.f32.xlu0 %v397
    %v399 = vpop.xlane.xlu0 %398
    %v400 = vsel %vm160, %v384, -inf
    %401 = vmax.xlane.f32.xlu0 %v400
    %v402 = vpop.xlane.xlu0 %401
    %v403 = vsel %vm160, %v385, -inf
    %404 = vmax.xlane.f32.xlu0 %v403
    %v405 = vpop.xlane.xlu0 %404
    %v406 = vsel %vm160, %v386, -inf
    %407 = vmax.xlane.f32.xlu0 %v406
    %v408 = vpop.xlane.xlu0 %407
    %v409 = vsel %vm160, %v387, -inf
    %410 = vmax.xlane.f32.xlu0 %v409
    %v411 = vpop.xlane.xlu0 %410
    %v412 = vsub.f32 %v380, %v390
    %v413 = vsub.f32 %v381, %v393
    %v414 = vsub.f32 %v382, %v396
    %v415 = vsub.f32 %v383, %v399
    %v416 = vsub.f32 %v384, %v402
    %v417 = vsub.f32 %v385, %v405
    %v418 = vsub.f32 %v386, %v408
    %v419 = vsub.f32 %v387, %v411
    %v420 = vmul.f32 %v412, 1.442695
    %v421 = vpow.pop %v420
    %v422 = vmul.f32 %v413, 1.442695
    %v423 = vpow.pop %v422
    %v424 = vmul.f32 %v414, 1.442695
    %v425 = vpow.pop %v424
    %v426 = vmul.f32 %v415, 1.442695
    %v427 = vpow.pop %v426
    %v428 = vmul.f32 %v416, 1.442695
    %v429 = vpow.pop %v428
    %v430 = vmul.f32 %v417, 1.442695
    %v431 = vpow.pop %v430
    %v432 = vmul.f32 %v418, 1.442695
    %v433 = vpow.pop %v432
    %v434 = vmul.f32 %v419, 1.442695
    %v435 = vpow.pop %v434
    %v436 = vsel %vm160, %v421, 0.0
    %437 = vadd.xlane.f32.xlu0 %v436
    %v438 = vpop.xlane.xlu0 %437
    %v439 = vsel %vm160, %v423, 0.0
    %440 = vadd.xlane.f32.xlu0 %v439
    %v441 = vpop.xlane.xlu0 %440
    %v442 = vsel %vm160, %v425, 0.0
    %443 = vadd.xlane.f32.xlu0 %v442
    %v444 = vpop.xlane.xlu0 %443
    %v445 = vsel %vm160, %v427, 0.0
    %446 = vadd.xlane.f32.xlu0 %v445
    %v447 = vpop.xlane.xlu0 %446
    %v448 = vsel %vm160, %v429, 0.0
    %449 = vadd.xlane.f32.xlu0 %v448
    %v450 = vpop.xlane.xlu0 %449
    %v451 = vsel %vm160, %v431, 0.0
    %452 = vadd.xlane.f32.xlu0 %v451
    %v453 = vpop.xlane.xlu0 %452
    %v454 = vsel %vm160, %v433, 0.0
    %455 = vadd.xlane.f32.xlu0 %v454
    %v456 = vpop.xlane.xlu0 %455
    %v457 = vsel %vm160, %v435, 0.0
    %458 = vadd.xlane.f32.xlu0 %v457
    %v459 = vpop.xlane.xlu0 %458
    %v460 = vrcp.pop %v438
    %v461 = vrcp.pop %v441
    %v462 = vrcp.pop %v444
    %v463 = vrcp.pop %v447
    %v464 = vrcp.pop %v450
    %v465 = vrcp.pop %v453
    %v466 = vrcp.pop %v456
    %v467 = vrcp.pop %v459
    %v468 = vmul.f32 %v421, %v460
    %v469 = vmul.f32 %v423, %v461
    %v470 = vmul.f32 %v425, %v462
    %v471 = vmul.f32 %v427, %v463
    %v472 = vmul.f32 %v429, %v464
    %v473 = vmul.f32 %v431, %v465
    %v474 = vmul.f32 %v433, %v466
    %v475 = vmul.f32 %v435, %v467
    %476 = vrot.lane.b32.xlu0 %v152, 64
    %v477 = vpop.permute.xlu0 %476
    %v480 = vsel %vm160, %v468, 0
    %482 = vmatpush.msra.mxu0 0.0
    %483 = vmatpush.msra.mxu0 0.0
    %484 = vmatpush.msra.mxu0 0.0
    %485 = vmatpush.msra.mxu0 0.0
    %486 = vmatpush.msra.mxu0 0.0
    %487 = vmatpush.msra.mxu0 0.0
    %488 = vmatpush.msra.mxu0 0.0
    %489 = vmatpush.msra.mxu0 0.0
    %490 = vmatpush.msra.mxu0 0.0
    %491 = vmatpush.msra.mxu0 0.0
    %492 = vmatpush.msra.mxu0 0.0
    %493 = vmatpush.msra.mxu0 0.0
    %494 = vmatpush.msra.mxu0 0.0
    %495 = vmatpush.msra.mxu0 0.0
    %496 = vmatpush.msra.mxu0 0.0
    %497 = vmatpush.msra.mxu0 %v477
    %498 = vmatmul.f32.gmra.mxu0 %v480
    %v499 = vpop.f32.mrf.mxu0
    %v500 = vadd.f32 0.0, %v499
    %501 = vdwg.mxu0
    %502 = vrot.lane.b32.xlu0 %v152, 56
    %v503 = vpop.permute.xlu0 %502
    %v506 = vsel %vm160, %v469, 0
    %508 = vmatpush.msra.mxu0 0.0
    %509 = vmatpush.msra.mxu0 0.0
    %510 = vmatpush.msra.mxu0 0.0
    %511 = vmatpush.msra.mxu0 0.0
    %512 = vmatpush.msra.mxu0 0.0
    %513 = vmatpush.msra.mxu0 0.0
    %514 = vmatpush.msra.mxu0 0.0
    %515 = vmatpush.msra.mxu0 0.0
    %516 = vmatpush.msra.mxu0 0.0
    %517 = vmatpush.msra.mxu0 0.0
    %518 = vmatpush.msra.mxu0 0.0
    %519 = vmatpush.msra.mxu0 0.0
    %520 = vmatpush.msra.mxu0 0.0
    %521 = vmatpush.msra.mxu0 0.0
    %522 = vmatpush.msra.mxu0 0.0
    %523 = vmatpush.msra.mxu0 %v503
    %524 = vmatmul.f32.gmra.mxu0 %v506
    %v525 = vpop.f32.mrf.mxu0
    %v526 = vadd.f32 0.0, %v525
    %527 = vdwg.mxu0
    %528 = vrot.lane.b32.xlu0 %v152, 48
    %v529 = vpop.permute.xlu0 %528
    %v532 = vsel %vm160, %v470, 0
    %534 = vmatpush.msra.mxu0 0.0
    %535 = vmatpush.msra.mxu0 0.0
    %536 = vmatpush.msra.mxu0 0.0
    %537 = vmatpush.msra.mxu0 0.0
    %538 = vmatpush.msra.mxu0 0.0
    %539 = vmatpush.msra.mxu0 0.0
    %540 = vmatpush.msra.mxu0 0.0
    %541 = vmatpush.msra.mxu0 0.0
    %542 = vmatpush.msra.mxu0 0.0
    %543 = vmatpush.msra.mxu0 0.0
    %544 = vmatpush.msra.mxu0 0.0
    %545 = vmatpush.msra.mxu0 0.0
    %546 = vmatpush.msra.mxu0 0.0
    %547 = vmatpush.msra.mxu0 0.0
    %548 = vmatpush.msra.mxu0 0.0
    %549 = vmatpush.msra.mxu0 %v529
    %550 = vmatmul.f32.gmra.mxu0 %v532
    %v551 = vpop.f32.mrf.mxu0
    %v552 = vadd.f32 0.0, %v551
    %553 = vdwg.mxu0
    %554 = vrot.lane.b32.xlu0 %v152, 40
    %v555 = vpop.permute.xlu0 %554
    %v558 = vsel %vm160, %v471, 0
    %560 = vmatpush.msra.mxu0 0.0
    %561 = vmatpush.msra.mxu0 0.0
    %562 = vmatpush.msra.mxu0 0.0
    %563 = vmatpush.msra.mxu0 0.0
    %564 = vmatpush.msra.mxu0 0.0
    %565 = vmatpush.msra.mxu0 0.0
    %566 = vmatpush.msra.mxu0 0.0
    %567 = vmatpush.msra.mxu0 0.0
    %568 = vmatpush.msra.mxu0 0.0
    %569 = vmatpush.msra.mxu0 0.0
    %570 = vmatpush.msra.mxu0 0.0
    %571 = vmatpush.msra.mxu0 0.0
    %572 = vmatpush.msra.mxu0 0.0
    %573 = vmatpush.msra.mxu0 0.0
    %574 = vmatpush.msra.mxu0 0.0
    %575 = vmatpush.msra.mxu0 %v555
    %576 = vmatmul.f32.gmra.mxu0 %v558
    %v577 = vpop.f32.mrf.mxu0
    %v578 = vadd.f32 0.0, %v577
    %579 = vdwg.mxu0
    %581 = vrot.lane.b32.xlu0 %v526, 8
    %v582 = vpop.permute.xlu0 %581
    %585 = vrot.lane.b32.xlu0 %v552, 16
    %v586 = vpop.permute.xlu0 %585
    %589 = vrot.lane.b32.xlu0 %v578, 24
    %v590 = vpop.permute.xlu0 %589
    %v592 = vsel %vm160, %v500, %v582
    %vm593 = vcmask 130048
    %v594 = vsel %vm593, %v592, %v586
    %vm595 = vcmask 195584
    %v596 = vsel %vm595, %v594, %v590
    %597 = vrot.lane.b32.xlu0 %v155, 64
    %v598 = vpop.permute.xlu0 %597
    %v601 = vsel %vm160, %v472, 0
    %603 = vmatpush.msra.mxu0 0.0
    %604 = vmatpush.msra.mxu0 0.0
    %605 = vmatpush.msra.mxu0 0.0
    %606 = vmatpush.msra.mxu0 0.0
    %607 = vmatpush.msra.mxu0 0.0
    %608 = vmatpush.msra.mxu0 0.0
    %609 = vmatpush.msra.mxu0 0.0
    %610 = vmatpush.msra.mxu0 0.0
    %611 = vmatpush.msra.mxu0 0.0
    %612 = vmatpush.msra.mxu0 0.0
    %613 = vmatpush.msra.mxu0 0.0
    %614 = vmatpush.msra.mxu0 0.0
    %615 = vmatpush.msra.mxu0 0.0
    %616 = vmatpush.msra.mxu0 0.0
    %617 = vmatpush.msra.mxu0 0.0
    %618 = vmatpush.msra.mxu0 %v598
    %619 = vmatmul.f32.gmra.mxu0 %v601
    %v620 = vpop.f32.mrf.mxu0
    %v621 = vadd.f32 0.0, %v620
    %622 = vdwg.mxu0
    %623 = vrot.lane.b32.xlu0 %v155, 56
    %v624 = vpop.permute.xlu0 %623
    %v627 = vsel %vm160, %v473, 0
    %629 = vmatpush.msra.mxu0 0.0
    %630 = vmatpush.msra.mxu0 0.0
    %631 = vmatpush.msra.mxu0 0.0
    %632 = vmatpush.msra.mxu0 0.0
    %633 = vmatpush.msra.mxu0 0.0
    %634 = vmatpush.msra.mxu0 0.0
    %635 = vmatpush.msra.mxu0 0.0
    %636 = vmatpush.msra.mxu0 0.0
    %637 = vmatpush.msra.mxu0 0.0
    %638 = vmatpush.msra.mxu0 0.0
    %639 = vmatpush.msra.mxu0 0.0
    %640 = vmatpush.msra.mxu0 0.0
    %641 = vmatpush.msra.mxu0 0.0
    %642 = vmatpush.msra.mxu0 0.0
    %643 = vmatpush.msra.mxu0 0.0
    %644 = vmatpush.msra.mxu0 %v624
    %645 = vmatmul.f32.gmra.mxu0 %v627
    %v646 = vpop.f32.mrf.mxu0
    %v647 = vadd.f32 0.0, %v646
    %648 = vdwg.mxu0
    %649 = vrot.lane.b32.xlu0 %v155, 48
    %v650 = vpop.permute.xlu0 %649
    %v653 = vsel %vm160, %v474, 0
    %655 = vmatpush.msra.mxu0 0.0
    %656 = vmatpush.msra.mxu0 0.0
    %657 = vmatpush.msra.mxu0 0.0
    %658 = vmatpush.msra.mxu0 0.0
    %659 = vmatpush.msra.mxu0 0.0
    %660 = vmatpush.msra.mxu0 0.0
    %661 = vmatpush.msra.mxu0 0.0
    %662 = vmatpush.msra.mxu0 0.0
    %663 = vmatpush.msra.mxu0 0.0
    %664 = vmatpush.msra.mxu0 0.0
    %665 = vmatpush.msra.mxu0 0.0
    %666 = vmatpush.msra.mxu0 0.0
    %667 = vmatpush.msra.mxu0 0.0
    %668 = vmatpush.msra.mxu0 0.0
    %669 = vmatpush.msra.mxu0 0.0
    %670 = vmatpush.msra.mxu0 %v650
    %671 = vmatmul.f32.gmra.mxu0 %v653
    %v672 = vpop.f32.mrf.mxu0
    %v673 = vadd.f32 0.0, %v672
    %674 = vdwg.mxu0
    %675 = vrot.lane.b32.xlu0 %v155, 40
    %v676 = vpop.permute.xlu0 %675
    %v679 = vsel %vm160, %v475, 0
    %681 = vmatpush.msra.mxu0 0.0
    %682 = vmatpush.msra.mxu0 0.0
    %683 = vmatpush.msra.mxu0 0.0
    %684 = vmatpush.msra.mxu0 0.0
    %685 = vmatpush.msra.mxu0 0.0
    %686 = vmatpush.msra.mxu0 0.0
    %687 = vmatpush.msra.mxu0 0.0
    %688 = vmatpush.msra.mxu0 0.0
    %689 = vmatpush.msra.mxu0 0.0
    %690 = vmatpush.msra.mxu0 0.0
    %691 = vmatpush.msra.mxu0 0.0
    %692 = vmatpush.msra.mxu0 0.0
    %693 = vmatpush.msra.mxu0 0.0
    %694 = vmatpush.msra.mxu0 0.0
    %695 = vmatpush.msra.mxu0 0.0
    %696 = vmatpush.msra.mxu0 %v676
    %697 = vmatmul.f32.gmra.mxu0 %v679
    %v698 = vpop.f32.mrf.mxu0
    %v699 = vadd.f32 0.0, %v698
    %700 = vdwg.mxu0
    %702 = vrot.lane.b32.xlu0 %v647, 8
    %v703 = vpop.permute.xlu0 %702
    %706 = vrot.lane.b32.xlu0 %v673, 16
    %v707 = vpop.permute.xlu0 %706
    %710 = vrot.lane.b32.xlu0 %v699, 24
    %v711 = vpop.permute.xlu0 %710
    %v713 = vsel %vm160, %v621, %v703
    %v714 = vsel %vm593, %v713, %v707
    %v715 = vsel %vm595, %v714, %v711
    %v717 = vperm.slane %v116, 0
    %v720 = vsel %vm127, %v596, 0
    %v723 = vsel %vm127, %v715, 0
    %725 = vmatpush.msra.mxu0 0.0
    %726 = vmatpush.msra.mxu0 0.0
    %727 = vmatpush.msra.mxu0 0.0
    %728 = vmatpush.msra.mxu0 0.0
    %729 = vmatpush.msra.mxu0 0.0
    %730 = vmatpush.msra.mxu0 0.0
    %731 = vmatpush.msra.mxu0 0.0
    %732 = vmatpush.msra.mxu0 0.0
    %733 = vmatpush.msra.mxu0 0.0
    %734 = vmatpush.msra.mxu0 0.0
    %735 = vmatpush.msra.mxu0 0.0
    %736 = vmatpush.msra.mxu0 0.0
    %737 = vmatpush.msra.mxu0 %v90
    %738 = vmatpush.msra.mxu0 %v89
    %739 = vmatpush.msra.mxu0 %v88
    %740 = vmatpush.msra.mxu0 %v87
    %741 = vmatmul.f32.gmra.mxu0 %v720
    %v742 = vpop.f32.mrf.mxu0
    %v743 = vadd.f32 %v717, %v742
    %744 = vmatmul.f32.gmra.mxu0 %v723
    %v745 = vpop.f32.mrf.mxu0
    %v746 = vadd.f32 %v717, %v745
    %747 = vdwg.mxu0
    %v748 = vadd.f32 %v79, %v743
    %v749 = vadd.f32 %v80, %v746
    %v750 = vsel %vm127, %v748, 0.0
    %751 = vadd.xlane.f32.xlu0 %v750
    %v752 = vpop.xlane.xlu0 %751
    %v753 = vsel %vm127, %v749, 0.0
    %754 = vadd.xlane.f32.xlu0 %v753
    %v755 = vpop.xlane.xlu0 %754
    %v756 = vrcp.pop 32.0
    %v757 = vmul.f32 32.0, %v756
    %v758 = vsub.f32 1.0, %v757
    %v759 = vmul.f32 %v756, %v758
    %v760 = vadd.f32 %v756, %v759
    %vm761 = vweird.f32 %v756
    %v762 = vsel %vm761, %v756, %v760
    %v763 = vmul.f32 %v752, %v762
    %v764 = vmul.f32 %v755, %v762
    %v765 = vsub.f32 %v748, %v763
    %v766 = vsub.f32 %v749, %v764
    %v767 = vmul.f32 %v765, %v765
    %v768 = vmul.f32 %v766, %v766
    %v769 = vsel %vm127, %v767, 0.0
    %770 = vadd.xlane.f32.xlu0 %v769
    %v771 = vpop.xlane.xlu0 %770
    %v772 = vsel %vm127, %v768, 0.0
    %773 = vadd.xlane.f32.xlu0 %v772
    %v774 = vpop.xlane.xlu0 %773
    %v775 = vmul.f32 %v771, %v762
    %v776 = vmul.f32 %v774, %v762
    %v777 = vadd.f32 %v775, 1e-05
    %v778 = vadd.f32 %v776, 1e-05
    %v779 = vrsqrt.pop %v777
    %v780 = vmul.f32 %v779, %v777
    %v781 = vmul.f32 %v780, %v779
    %v782 = vmul.f32 0.5, %v781
    %v783 = vsub.f32 1.5, %v782
    %v784 = vmul.f32 %v779, %v783
    %vm785 = vweird.f32 %v777
    %vm786 = vweird.f32 %v779
    %vm787 = vmor %vm785, %vm786
    %v788 = vsel %vm787, %v779, %v784
    %v789 = vrsqrt.pop %v778
    %v790 = vmul.f32 %v789, %v778
    %v791 = vmul.f32 %v790, %v789
    %v792 = vmul.f32 0.5, %v791
    %v793 = vsub.f32 1.5, %v792
    %v794 = vmul.f32 %v789, %v793
    %vm795 = vweird.f32 %v778
    %vm796 = vweird.f32 %v789
    %vm797 = vmor %vm795, %vm796
    %v798 = vsel %vm797, %v789, %v794
    %v799 = vmul.f32 %v765, %v788
    %v800 = vmul.f32 %v766, %v798
    %v802 = vperm.slane %v122, 0
    %v804 = vmul.f32 %v799, %v802
    %v805 = vmul.f32 %v800, %v802
    %v807 = vperm.slane %v123, 0
    %v809 = vadd.f32 %v804, %v807
    %v810 = vadd.f32 %v805, %v807
    %v812 = vperm.slane %v117, 0
    %v815 = vsel %vm127, %v809, 0
    %v818 = vsel %vm127, %v810, 0
    %820 = vmatpush.msra.mxu0 0.0
    %821 = vmatpush.msra.mxu0 0.0
    %822 = vmatpush.msra.mxu0 0.0
    %823 = vmatpush.msra.mxu0 0.0
    %824 = vmatpush.msra.mxu0 0.0
    %825 = vmatpush.msra.mxu0 0.0
    %826 = vmatpush.msra.mxu0 0.0
    %827 = vmatpush.msra.mxu0 0.0
    %828 = vmatpush.msra.mxu0 0.0
    %829 = vmatpush.msra.mxu0 0.0
    %830 = vmatpush.msra.mxu0 0.0
    %831 = vmatpush.msra.mxu0 0.0
    %832 = vmatpush.msra.mxu0 %v94
    %833 = vmatpush.msra.mxu0 %v93
    %834 = vmatpush.msra.mxu0 %v92
    %835 = vmatpush.msra.mxu0 %v91
    %836 = vmatmul.f32.gmra.mxu0 %v815
    %v837 = vpop.f32.mrf.mxu0
    %v838 = vadd.f32 %v812, %v837
    %839 = vmatmul.f32.gmra.mxu0 %v818
    %v840 = vpop.f32.mrf.mxu0
    %v841 = vadd.f32 %v812, %v840
    %842 = vdwg.mxu0
    %v844 = vperm.slane %v118, 0
    %v847 = vsel %vm127, %v81, 0
    %v850 = vsel %vm127, %v82, 0
    %852 = vmatpush.msra.mxu0 0.0
    %853 = vmatpush.msra.mxu0 0.0
    %854 = vmatpush.msra.mxu0 0.0
    %855 = vmatpush.msra.mxu0 0.0
    %856 = vmatpush.msra.mxu0 0.0
    %857 = vmatpush.msra.mxu0 0.0
    %858 = vmatpush.msra.mxu0 0.0
    %859 = vmatpush.msra.mxu0 0.0
    %860 = vmatpush.msra.mxu0 0.0
    %861 = vmatpush.msra.mxu0 0.0
    %862 = vmatpush.msra.mxu0 0.0
    %863 = vmatpush.msra.mxu0 0.0
    %864 = vmatpush.msra.mxu0 %v98
    %865 = vmatpush.msra.mxu0 %v97
    %866 = vmatpush.msra.mxu0 %v96
    %867 = vmatpush.msra.mxu0 %v95
    %868 = vmatmul.f32.gmra.mxu0 %v847
    %v869 = vpop.f32.mrf.mxu0
    %v870 = vadd.f32 %v844, %v869
    %871 = vmatmul.f32.gmra.mxu0 %v850
    %v872 = vpop.f32.mrf.mxu0
    %v873 = vadd.f32 %v844, %v872
    %874 = vdwg.mxu0
    %v876 = vsel %vm160, %v838, 0
    %v879 = vsel %vm160, %v870, 0
    %881 = vmatpush.xpose.msra.mxu0 0.0
    %882 = vmatpush.xpose.msra.mxu0 0.0
    %883 = vmatpush.xpose.msra.mxu0 0.0
    %884 = vmatpush.xpose.msra.mxu0 0.0
    %885 = vmatpush.xpose.msra.mxu0 0.0
    %886 = vmatpush.xpose.msra.mxu0 0.0
    %887 = vmatpush.xpose.msra.mxu0 0.0
    %888 = vmatpush.xpose.msra.mxu0 0.0
    %889 = vmatpush.xpose.msra.mxu0 0.0
    %890 = vmatpush.xpose.msra.mxu0 0.0
    %891 = vmatpush.xpose.msra.mxu0 0.0
    %892 = vmatpush.xpose.msra.mxu0 0.0
    %893 = vmatpush.xpose.msra.mxu0 0.0
    %894 = vmatpush.xpose.msra.mxu0 0.0
    %895 = vmatpush.xpose.msra.mxu0 0.0
    %896 = vmatpush.xpose.msra.mxu0 %v879
    %897 = vmatmul.f32.gmra.mxu0 %v876
    %v898 = vpop.f32.mrf.mxu0
    %v899 = vadd.f32 0.0, %v898
    %900 = vdwg.mxu0
    %901 = vrot.lane.b32.xlu0 %v838, 120
    %v902 = vpop.permute.xlu0 %901
    %903 = vrot.lane.b32.xlu0 %v870, 120
    %v904 = vpop.permute.xlu0 %903
    %v905 = vsel %vm160, %v902, 0
    %v907 = vsel %vm160, %v904, 0
    %909 = vmatpush.xpose.msra.mxu0 0.0
    %910 = vmatpush.xpose.msra.mxu0 0.0
    %911 = vmatpush.xpose.msra.mxu0 0.0
    %912 = vmatpush.xpose.msra.mxu0 0.0
    %913 = vmatpush.xpose.msra.mxu0 0.0
    %914 = vmatpush.xpose.msra.mxu0 0.0
    %915 = vmatpush.xpose.msra.mxu0 0.0
    %916 = vmatpush.xpose.msra.mxu0 0.0
    %917 = vmatpush.xpose.msra.mxu0 0.0
    %918 = vmatpush.xpose.msra.mxu0 0.0
    %919 = vmatpush.xpose.msra.mxu0 0.0
    %920 = vmatpush.xpose.msra.mxu0 0.0
    %921 = vmatpush.xpose.msra.mxu0 0.0
    %922 = vmatpush.xpose.msra.mxu0 0.0
    %923 = vmatpush.xpose.msra.mxu0 0.0
    %924 = vmatpush.xpose.msra.mxu0 %v907
    %925 = vmatmul.f32.gmra.mxu0 %v905
    %v926 = vpop.f32.mrf.mxu0
    %v927 = vadd.f32 0.0, %v926
    %928 = vdwg.mxu0
    %929 = vrot.lane.b32.xlu0 %v838, 112
    %v930 = vpop.permute.xlu0 %929
    %931 = vrot.lane.b32.xlu0 %v870, 112
    %v932 = vpop.permute.xlu0 %931
    %v933 = vsel %vm160, %v930, 0
    %v935 = vsel %vm160, %v932, 0
    %937 = vmatpush.xpose.msra.mxu0 0.0
    %938 = vmatpush.xpose.msra.mxu0 0.0
    %939 = vmatpush.xpose.msra.mxu0 0.0
    %940 = vmatpush.xpose.msra.mxu0 0.0
    %941 = vmatpush.xpose.msra.mxu0 0.0
    %942 = vmatpush.xpose.msra.mxu0 0.0
    %943 = vmatpush.xpose.msra.mxu0 0.0
    %944 = vmatpush.xpose.msra.mxu0 0.0
    %945 = vmatpush.xpose.msra.mxu0 0.0
    %946 = vmatpush.xpose.msra.mxu0 0.0
    %947 = vmatpush.xpose.msra.mxu0 0.0
    %948 = vmatpush.xpose.msra.mxu0 0.0
    %949 = vmatpush.xpose.msra.mxu0 0.0
    %950 = vmatpush.xpose.msra.mxu0 0.0
    %951 = vmatpush.xpose.msra.mxu0 0.0
    %952 = vmatpush.xpose.msra.mxu0 %v935
    %953 = vmatmul.f32.gmra.mxu0 %v933
    %v954 = vpop.f32.mrf.mxu0
    %v955 = vadd.f32 0.0, %v954
    %956 = vdwg.mxu0
    %957 = vrot.lane.b32.xlu0 %v838, 104
    %v958 = vpop.permute.xlu0 %957
    %959 = vrot.lane.b32.xlu0 %v870, 104
    %v960 = vpop.permute.xlu0 %959
    %v961 = vsel %vm160, %v958, 0
    %v963 = vsel %vm160, %v960, 0
    %965 = vmatpush.xpose.msra.mxu0 0.0
    %966 = vmatpush.xpose.msra.mxu0 0.0
    %967 = vmatpush.xpose.msra.mxu0 0.0
    %968 = vmatpush.xpose.msra.mxu0 0.0
    %969 = vmatpush.xpose.msra.mxu0 0.0
    %970 = vmatpush.xpose.msra.mxu0 0.0
    %971 = vmatpush.xpose.msra.mxu0 0.0
    %972 = vmatpush.xpose.msra.mxu0 0.0
    %973 = vmatpush.xpose.msra.mxu0 0.0
    %974 = vmatpush.xpose.msra.mxu0 0.0
    %975 = vmatpush.xpose.msra.mxu0 0.0
    %976 = vmatpush.xpose.msra.mxu0 0.0
    %977 = vmatpush.xpose.msra.mxu0 0.0
    %978 = vmatpush.xpose.msra.mxu0 0.0
    %979 = vmatpush.xpose.msra.mxu0 0.0
    %980 = vmatpush.xpose.msra.mxu0 %v963
    %981 = vmatmul.f32.gmra.mxu0 %v961
    %v982 = vpop.f32.mrf.mxu0
    %v983 = vadd.f32 0.0, %v982
    %984 = vdwg.mxu0
    %v986 = vsel %vm160, %v841, 0
    %v989 = vsel %vm160, %v873, 0
    %991 = vmatpush.xpose.msra.mxu0 0.0
    %992 = vmatpush.xpose.msra.mxu0 0.0
    %993 = vmatpush.xpose.msra.mxu0 0.0
    %994 = vmatpush.xpose.msra.mxu0 0.0
    %995 = vmatpush.xpose.msra.mxu0 0.0
    %996 = vmatpush.xpose.msra.mxu0 0.0
    %997 = vmatpush.xpose.msra.mxu0 0.0
    %998 = vmatpush.xpose.msra.mxu0 0.0
    %999 = vmatpush.xpose.msra.mxu0 0.0
    %1000 = vmatpush.xpose.msra.mxu0 0.0
    %1001 = vmatpush.xpose.msra.mxu0 0.0
    %1002 = vmatpush.xpose.msra.mxu0 0.0
    %1003 = vmatpush.xpose.msra.mxu0 0.0
    %1004 = vmatpush.xpose.msra.mxu0 0.0
    %1005 = vmatpush.xpose.msra.mxu0 0.0
    %1006 = vmatpush.xpose.msra.mxu0 %v989
    %1007 = vmatmul.f32.gmra.mxu0 %v986
    %v1008 = vpop.f32.mrf.mxu0
    %v1009 = vadd.f32 0.0, %v1008
    %1010 = vdwg.mxu0
    %1011 = vrot.lane.b32.xlu0 %v841, 120
    %v1012 = vpop.permute.xlu0 %1011
    %1013 = vrot.lane.b32.xlu0 %v873, 120
    %v1014 = vpop.permute.xlu0 %1013
    %v1015 = vsel %vm160, %v1012, 0
    %v1017 = vsel %vm160, %v1014, 0
    %1019 = vmatpush.xpose.msra.mxu0 0.0
    %1020 = vmatpush.xpose.msra.mxu0 0.0
    %1021 = vmatpush.xpose.msra.mxu0 0.0
    %1022 = vmatpush.xpose.msra.mxu0 0.0
    %1023 = vmatpush.xpose.msra.mxu0 0.0
    %1024 = vmatpush.xpose.msra.mxu0 0.0
    %1025 = vmatpush.xpose.msra.mxu0 0.0
    %1026 = vmatpush.xpose.msra.mxu0 0.0
    %1027 = vmatpush.xpose.msra.mxu0 0.0
    %1028 = vmatpush.xpose.msra.mxu0 0.0
    %1029 = vmatpush.xpose.msra.mxu0 0.0
    %1030 = vmatpush.xpose.msra.mxu0 0.0
    %1031 = vmatpush.xpose.msra.mxu0 0.0
    %1032 = vmatpush.xpose.msra.mxu0 0.0
    %1033 = vmatpush.xpose.msra.mxu0 0.0
    %1034 = vmatpush.xpose.msra.mxu0 %v1017
    %1035 = vmatmul.f32.gmra.mxu0 %v1015
    %v1036 = vpop.f32.mrf.mxu0
    %v1037 = vadd.f32 0.0, %v1036
    %1038 = vdwg.mxu0
    %1039 = vrot.lane.b32.xlu0 %v841, 112
    %v1040 = vpop.permute.xlu0 %1039
    %1041 = vrot.lane.b32.xlu0 %v873, 112
    %v1042 = vpop.permute.xlu0 %1041
    %v1043 = vsel %vm160, %v1040, 0
    %v1045 = vsel %vm160, %v1042, 0
    %1047 = vmatpush.xpose.msra.mxu0 0.0
    %1048 = vmatpush.xpose.msra.mxu0 0.0
    %1049 = vmatpush.xpose.msra.mxu0 0.0
    %1050 = vmatpush.xpose.msra.mxu0 0.0
    %1051 = vmatpush.xpose.msra.mxu0 0.0
    %1052 = vmatpush.xpose.msra.mxu0 0.0
    %1053 = vmatpush.xpose.msra.mxu0 0.0
    %1054 = vmatpush.xpose.msra.mxu0 0.0
    %1055 = vmatpush.xpose.msra.mxu0 0.0
    %1056 = vmatpush.xpose.msra.mxu0 0.0
    %1057 = vmatpush.xpose.msra.mxu0 0.0
    %1058 = vmatpush.xpose.msra.mxu0 0.0
    %1059 = vmatpush.xpose.msra.mxu0 0.0
    %1060 = vmatpush.xpose.msra.mxu0 0.0
    %1061 = vmatpush.xpose.msra.mxu0 0.0
    %1062 = vmatpush.xpose.msra.mxu0 %v1045
    %1063 = vmatmul.f32.gmra.mxu0 %v1043
    %v1064 = vpop.f32.mrf.mxu0
    %v1065 = vadd.f32 0.0, %v1064
    %1066 = vdwg.mxu0
    %1067 = vrot.lane.b32.xlu0 %v841, 104
    %v1068 = vpop.permute.xlu0 %1067
    %1069 = vrot.lane.b32.xlu0 %v873, 104
    %v1070 = vpop.permute.xlu0 %1069
    %v1071 = vsel %vm160, %v1068, 0
    %v1073 = vsel %vm160, %v1070, 0
    %1075 = vmatpush.xpose.msra.mxu0 0.0
    %1076 = vmatpush.xpose.msra.mxu0 0.0
    %1077 = vmatpush.xpose.msra.mxu0 0.0
    %1078 = vmatpush.xpose.msra.mxu0 0.0
    %1079 = vmatpush.xpose.msra.mxu0 0.0
    %1080 = vmatpush.xpose.msra.mxu0 0.0
    %1081 = vmatpush.xpose.msra.mxu0 0.0
    %1082 = vmatpush.xpose.msra.mxu0 0.0
    %1083 = vmatpush.xpose.msra.mxu0 0.0
    %1084 = vmatpush.xpose.msra.mxu0 0.0
    %1085 = vmatpush.xpose.msra.mxu0 0.0
    %1086 = vmatpush.xpose.msra.mxu0 0.0
    %1087 = vmatpush.xpose.msra.mxu0 0.0
    %1088 = vmatpush.xpose.msra.mxu0 0.0
    %1089 = vmatpush.xpose.msra.mxu0 0.0
    %1090 = vmatpush.xpose.msra.mxu0 %v1073
    %1091 = vmatmul.f32.gmra.mxu0 %v1071
    %v1092 = vpop.f32.mrf.mxu0
    %v1093 = vadd.f32 0.0, %v1092
    %1094 = vdwg.mxu0
    %v1095 = vmul.f32 %v899, 0.35355338
    %v1096 = vmul.f32 %v927, 0.35355338
    %v1097 = vmul.f32 %v955, 0.35355338
    %v1098 = vmul.f32 %v983, 0.35355338
    %v1099 = vmul.f32 %v1009, 0.35355338
    %v1100 = vmul.f32 %v1037, 0.35355338
    %v1101 = vmul.f32 %v1065, 0.35355338
    %v1102 = vmul.f32 %v1093, 0.35355338
    %v1103 = vsel %vm160, %v1095, -inf
    %1104 = vmax.xlane.f32.xlu0 %v1103
    %v1105 = vpop.xlane.xlu0 %1104
    %v1106 = vsel %vm160, %v1096, -inf
    %1107 = vmax.xlane.f32.xlu0 %v1106
    %v1108 = vpop.xlane.xlu0 %1107
    %v1109 = vsel %vm160, %v1097, -inf
    %1110 = vmax.xlane.f32.xlu0 %v1109
    %v1111 = vpop.xlane.xlu0 %1110
    %v1112 = vsel %vm160, %v1098, -inf
    %1113 = vmax.xlane.f32.xlu0 %v1112
    %v1114 = vpop.xlane.xlu0 %1113
    %v1115 = vsel %vm160, %v1099, -inf
    %1116 = vmax.xlane.f32.xlu0 %v1115
    %v1117 = vpop.xlane.xlu0 %1116
    %v1118 = vsel %vm160, %v1100, -inf
    %1119 = vmax.xlane.f32.xlu0 %v1118
    %v1120 = vpop.xlane.xlu0 %1119
    %v1121 = vsel %vm160, %v1101, -inf
    %1122 = vmax.xlane.f32.xlu0 %v1121
    %v1123 = vpop.xlane.xlu0 %1122
    %v1124 = vsel %vm160, %v1102, -inf
    %1125 = vmax.xlane.f32.xlu0 %v1124
    %v1126 = vpop.xlane.xlu0 %1125
    %v1127 = vsub.f32 %v1095, %v1105
    %v1128 = vsub.f32 %v1096, %v1108
    %v1129 = vsub.f32 %v1097, %v1111
    %v1130 = vsub.f32 %v1098, %v1114
    %v1131 = vsub.f32 %v1099, %v1117
    %v1132 = vsub.f32 %v1100, %v1120
    %v1133 = vsub.f32 %v1101, %v1123
    %v1134 = vsub.f32 %v1102, %v1126
    %v1135 = vmul.f32 %v1127, 1.442695
    %v1136 = vpow.pop %v1135
    %v1137 = vmul.f32 %v1128, 1.442695
    %v1138 = vpow.pop %v1137
    %v1139 = vmul.f32 %v1129, 1.442695
    %v1140 = vpow.pop %v1139
    %v1141 = vmul.f32 %v1130, 1.442695
    %v1142 = vpow.pop %v1141
    %v1143 = vmul.f32 %v1131, 1.442695
    %v1144 = vpow.pop %v1143
    %v1145 = vmul.f32 %v1132, 1.442695
    %v1146 = vpow.pop %v1145
    %v1147 = vmul.f32 %v1133, 1.442695
    %v1148 = vpow.pop %v1147
    %v1149 = vmul.f32 %v1134, 1.442695
    %v1150 = vpow.pop %v1149
    %v1151 = vsel %vm160, %v1136, 0.0
    %1152 = vadd.xlane.f32.xlu0 %v1151
    %v1153 = vpop.xlane.xlu0 %1152
    %v1154 = vsel %vm160, %v1138, 0.0
    %1155 = vadd.xlane.f32.xlu0 %v1154
    %v1156 = vpop.xlane.xlu0 %1155
    %v1157 = vsel %vm160, %v1140, 0.0
    %1158 = vadd.xlane.f32.xlu0 %v1157
    %v1159 = vpop.xlane.xlu0 %1158
    %v1160 = vsel %vm160, %v1142, 0.0
    %1161 = vadd.xlane.f32.xlu0 %v1160
    %v1162 = vpop.xlane.xlu0 %1161
    %v1163 = vsel %vm160, %v1144, 0.0
    %1164 = vadd.xlane.f32.xlu0 %v1163
    %v1165 = vpop.xlane.xlu0 %1164
    %v1166 = vsel %vm160, %v1146, 0.0
    %1167 = vadd.xlane.f32.xlu0 %v1166
    %v1168 = vpop.xlane.xlu0 %1167
    %v1169 = vsel %vm160, %v1148, 0.0
    %1170 = vadd.xlane.f32.xlu0 %v1169
    %v1171 = vpop.xlane.xlu0 %1170
    %v1172 = vsel %vm160, %v1150, 0.0
    %1173 = vadd.xlane.f32.xlu0 %v1172
    %v1174 = vpop.xlane.xlu0 %1173
    %v1175 = vrcp.pop %v1153
    %v1176 = vmul.f32 %v1153, %v1175
    %v1177 = vsub.f32 1.0, %v1176
    %v1178 = vmul.f32 %v1175, %v1177
    %v1179 = vadd.f32 %v1175, %v1178
    %vm1180 = vweird.f32 %v1153
    %vm1181 = vweird.f32 %v1175
    %vm1182 = vmor %vm1180, %vm1181
    %v1183 = vsel %vm1182, %v1175, %v1179
    %v1184 = vand.u32 2147483647, %v1153
    %vm1185 = vcmp.eq.f32.partialorder %v1184, 8.507059e+37
    %v1186 = vand.u32 %v1153, 2147483648
    %v1187 = vor.u32 1.1754944e-38, %v1186
    %v1188 = vsel %vm1185, %v1187, %v1183
    %v1189 = vmul.f32 %v1136, %v1188
    %v1190 = vrcp.pop %v1156
    %v1191 = vmul.f32 %v1156, %v1190
    %v1192 = vsub.f32 1.0, %v1191
    %v1193 = vmul.f32 %v1190, %v1192
    %v1194 = vadd.f32 %v1190, %v1193
    %vm1195 = vweird.f32 %v1156
    %vm1196 = vweird.f32 %v1190
    %vm1197 = vmor %vm1195, %vm1196
    %v1198 = vsel %vm1197, %v1190, %v1194
    %v1199 = vand.u32 2147483647, %v1156
    %vm1200 = vcmp.eq.f32.partialorder %v1199, 8.507059e+37
    %v1201 = vand.u32 %v1156, 2147483648
    %v1202 = vor.u32 1.1754944e-38, %v1201
    %v1203 = vsel %vm1200, %v1202, %v1198
    %v1204 = vmul.f32 %v1138, %v1203
    %v1205 = vrcp.pop %v1159
    %v1206 = vmul.f32 %v1159, %v1205
    %v1207 = vsub.f32 1.0, %v1206
    %v1208 = vmul.f32 %v1205, %v1207
    %v1209 = vadd.f32 %v1205, %v1208
    %vm1210 = vweird.f32 %v1159
    %vm1211 = vweird.f32 %v1205
    %vm1212 = vmor %vm1210, %vm1211
    %v1213 = vsel %vm1212, %v1205, %v1209
    %v1214 = vand.u32 2147483647, %v1159
    %vm1215 = vcmp.eq.f32.partialorder %v1214, 8.507059e+37
    %v1216 = vand.u32 %v1159, 2147483648
    %v1217 = vor.u32 1.1754944e-38, %v1216
    %v1218 = vsel %vm1215, %v1217, %v1213
    %v1219 = vmul.f32 %v1140, %v1218
    %v1220 = vrcp.pop %v1162
    %v1221 = vmul.f32 %v1162, %v1220
    %v1222 = vsub.f32 1.0, %v1221
    %v1223 = vmul.f32 %v1220, %v1222
    %v1224 = vadd.f32 %v1220, %v1223
    %vm1225 = vweird.f32 %v1162
    %vm1226 = vweird.f32 %v1220
    %vm1227 = vmor %vm1225, %vm1226
    %v1228 = vsel %vm1227, %v1220, %v1224
    %v1229 = vand.u32 2147483647, %v1162
    %vm1230 = vcmp.eq.f32.partialorder %v1229, 8.507059e+37
    %v1231 = vand.u32 %v1162, 2147483648
    %v1232 = vor.u32 1.1754944e-38, %v1231
    %v1233 = vsel %vm1230, %v1232, %v1228
    %v1234 = vmul.f32 %v1142, %v1233
    %v1235 = vrcp.pop %v1165
    %v1236 = vmul.f32 %v1165, %v1235
    %v1237 = vsub.f32 1.0, %v1236
    %v1238 = vmul.f32 %v1235, %v1237
    %v1239 = vadd.f32 %v1235, %v1238
    %vm1240 = vweird.f32 %v1165
    %vm1241 = vweird.f32 %v1235
    %vm1242 = vmor %vm1240, %vm1241
    %v1243 = vsel %vm1242, %v1235, %v1239
    %v1244 = vand.u32 2147483647, %v1165
    %vm1245 = vcmp.eq.f32.partialorder %v1244, 8.507059e+37
    %v1246 = vand.u32 %v1165, 2147483648
    %v1247 = vor.u32 1.1754944e-38, %v1246
    %v1248 = vsel %vm1245, %v1247, %v1243
    %v1249 = vmul.f32 %v1144, %v1248
    %v1250 = vrcp.pop %v1168
    %v1251 = vmul.f32 %v1168, %v1250
    %v1252 = vsub.f32 1.0, %v1251
    %v1253 = vmul.f32 %v1250, %v1252
    %v1254 = vadd.f32 %v1250, %v1253
    %vm1255 = vweird.f32 %v1168
    %vm1256 = vweird.f32 %v1250
    %vm1257 = vmor %vm1255, %vm1256
    %v1258 = vsel %vm1257, %v1250, %v1254
    %v1259 = vand.u32 2147483647, %v1168
    %vm1260 = vcmp.eq.f32.partialorder %v1259, 8.507059e+37
    %v1261 = vand.u32 %v1168, 2147483648
    %v1262 = vor.u32 1.1754944e-38, %v1261
    %v1263 = vsel %vm1260, %v1262, %v1258
    %v1264 = vmul.f32 %v1146, %v1263
    %v1265 = vrcp.pop %v1171
    %v1266 = vmul.f32 %v1171, %v1265
    %v1267 = vsub.f32 1.0, %v1266
    %v1268 = vmul.f32 %v1265, %v1267
    %v1269 = vadd.f32 %v1265, %v1268
    %vm1270 = vweird.f32 %v1171
    %vm1271 = vweird.f32 %v1265
    %vm1272 = vmor %vm1270, %vm1271
    %v1273 = vsel %vm1272, %v1265, %v1269
    %v1274 = vand.u32 2147483647, %v1171
    %vm1275 = vcmp.eq.f32.partialorder %v1274, 8.507059e+37
    %v1276 = vand.u32 %v1171, 2147483648
    %v1277 = vor.u32 1.1754944e-38, %v1276
    %v1278 = vsel %vm1275, %v1277, %v1273
    %v1279 = vmul.f32 %v1148, %v1278
    %v1280 = vrcp.pop %v1174
    %v1281 = vmul.f32 %v1174, %v1280
    %v1282 = vsub.f32 1.0, %v1281
    %v1283 = vmul.f32 %v1280, %v1282
    %v1284 = vadd.f32 %v1280, %v1283
    %vm1285 = vweird.f32 %v1174
    %vm1286 = vweird.f32 %v1280
    %vm1287 = vmor %vm1285, %vm1286
    %v1288 = vsel %vm1287, %v1280, %v1284
    %v1289 = vand.u32 2147483647, %v1174
    %vm1290 = vcmp.eq.f32.partialorder %v1289, 8.507059e+37
    %v1291 = vand.u32 %v1174, 2147483648
    %v1292 = vor.u32 1.1754944e-38, %v1291
    %v1293 = vsel %vm1290, %v1292, %v1288
    %v1294 = vmul.f32 %v1150, %v1293
    %1295 = vrot.lane.b32.xlu0 %v870, 96
    %v1296 = vpop.permute.xlu0 %1295
    %v1299 = vsel %vm160, %v1189, 0
    %1301 = vmatpush.msra.mxu0 0.0
    %1302 = vmatpush.msra.mxu0 0.0
    %1303 = vmatpush.msra.mxu0 0.0
    %1304 = vmatpush.msra.mxu0 0.0
    %1305 = vmatpush.msra.mxu0 0.0
    %1306 = vmatpush.msra.mxu0 0.0
    %1307 = vmatpush.msra.mxu0 0.0
    %1308 = vmatpush.msra.mxu0 0.0
    %1309 = vmatpush.msra.mxu0 0.0
    %1310 = vmatpush.msra.mxu0 0.0
    %1311 = vmatpush.msra.mxu0 0.0
    %1312 = vmatpush.msra.mxu0 0.0
    %1313 = vmatpush.msra.mxu0 0.0
    %1314 = vmatpush.msra.mxu0 0.0
    %1315 = vmatpush.msra.mxu0 0.0
    %1316 = vmatpush.msra.mxu0 %v1296
    %1317 = vmatmul.f32.gmra.mxu0 %v1299
    %v1318 = vpop.f32.mrf.mxu0
    %v1319 = vadd.f32 0.0, %v1318
    %1320 = vdwg.mxu0
    %1321 = vrot.lane.b32.xlu0 %v870, 88
    %v1322 = vpop.permute.xlu0 %1321
    %v1325 = vsel %vm160, %v1204, 0
    %1327 = vmatpush.msra.mxu0 0.0
    %1328 = vmatpush.msra.mxu0 0.0
    %1329 = vmatpush.msra.mxu0 0.0
    %1330 = vmatpush.msra.mxu0 0.0
    %1331 = vmatpush.msra.mxu0 0.0
    %1332 = vmatpush.msra.mxu0 0.0
    %1333 = vmatpush.msra.mxu0 0.0
    %1334 = vmatpush.msra.mxu0 0.0
    %1335 = vmatpush.msra.mxu0 0.0
    %1336 = vmatpush.msra.mxu0 0.0
    %1337 = vmatpush.msra.mxu0 0.0
    %1338 = vmatpush.msra.mxu0 0.0
    %1339 = vmatpush.msra.mxu0 0.0
    %1340 = vmatpush.msra.mxu0 0.0
    %1341 = vmatpush.msra.mxu0 0.0
    %1342 = vmatpush.msra.mxu0 %v1322
    %1343 = vmatmul.f32.gmra.mxu0 %v1325
    %v1344 = vpop.f32.mrf.mxu0
    %v1345 = vadd.f32 0.0, %v1344
    %1346 = vdwg.mxu0
    %1347 = vrot.lane.b32.xlu0 %v870, 80
    %v1348 = vpop.permute.xlu0 %1347
    %v1351 = vsel %vm160, %v1219, 0
    %1353 = vmatpush.msra.mxu0 0.0
    %1354 = vmatpush.msra.mxu0 0.0
    %1355 = vmatpush.msra.mxu0 0.0
    %1356 = vmatpush.msra.mxu0 0.0
    %1357 = vmatpush.msra.mxu0 0.0
    %1358 = vmatpush.msra.mxu0 0.0
    %1359 = vmatpush.msra.mxu0 0.0
    %1360 = vmatpush.msra.mxu0 0.0
    %1361 = vmatpush.msra.mxu0 0.0
    %1362 = vmatpush.msra.mxu0 0.0
    %1363 = vmatpush.msra.mxu0 0.0
    %1364 = vmatpush.msra.mxu0 0.0
    %1365 = vmatpush.msra.mxu0 0.0
    %1366 = vmatpush.msra.mxu0 0.0
    %1367 = vmatpush.msra.mxu0 0.0
    %1368 = vmatpush.msra.mxu0 %v1348
    %1369 = vmatmul.f32.gmra.mxu0 %v1351
    %v1370 = vpop.f32.mrf.mxu0
    %v1371 = vadd.f32 0.0, %v1370
    %1372 = vdwg.mxu0
    %1373 = vrot.lane.b32.xlu0 %v870, 72
    %v1374 = vpop.permute.xlu0 %1373
    %v1377 = vsel %vm160, %v1234, 0
    %1379 = vmatpush.msra.mxu0 0.0
    %1380 = vmatpush.msra.mxu0 0.0
    %1381 = vmatpush.msra.mxu0 0.0
    %1382 = vmatpush.msra.mxu0 0.0
    %1383 = vmatpush.msra.mxu0 0.0
    %1384 = vmatpush.msra.mxu0 0.0
    %1385 = vmatpush.msra.mxu0 0.0
    %1386 = vmatpush.msra.mxu0 0.0
    %1387 = vmatpush.msra.mxu0 0.0
    %1388 = vmatpush.msra.mxu0 0.0
    %1389 = vmatpush.msra.mxu0 0.0
    %1390 = vmatpush.msra.mxu0 0.0
    %1391 = vmatpush.msra.mxu0 0.0
    %1392 = vmatpush.msra.mxu0 0.0
    %1393 = vmatpush.msra.mxu0 0.0
    %1394 = vmatpush.msra.mxu0 %v1374
    %1395 = vmatmul.f32.gmra.mxu0 %v1377
    %v1396 = vpop.f32.mrf.mxu0
    %v1397 = vadd.f32 0.0, %v1396
    %1398 = vdwg.mxu0
    %1400 = vrot.lane.b32.xlu0 %v1345, 8
    %v1401 = vpop.permute.xlu0 %1400
    %1404 = vrot.lane.b32.xlu0 %v1371, 16
    %v1405 = vpop.permute.xlu0 %1404
    %1408 = vrot.lane.b32.xlu0 %v1397, 24
    %v1409 = vpop.permute.xlu0 %1408
    %v1411 = vsel %vm160, %v1319, %v1401
    %v1412 = vsel %vm593, %v1411, %v1405
    %v1413 = vsel %vm595, %v1412, %v1409
    %1414 = vrot.lane.b32.xlu0 %v1204, 8
    %v1415 = vpop.permute.xlu0 %1414
    %1417 = vrot.lane.b32.xlu0 %v1219, 16
    %v1418 = vpop.permute.xlu0 %1417
    %1420 = vrot.lane.b32.xlu0 %v1234, 24
    %v1421 = vpop.permute.xlu0 %1420
    %v1423 = vsel %vm160, %v1189, %v1415
    %v1424 = vsel %vm593, %v1423, %v1418
    %v1425 = vsel %vm595, %v1424, %v1421
    %1426 = vrot.lane.b32.xlu0 %v873, 96
    %v1427 = vpop.permute.xlu0 %1426
    %v1430 = vsel %vm160, %v1249, 0
    %1432 = vmatpush.msra.mxu0 0.0
    %1433 = vmatpush.msra.mxu0 0.0
    %1434 = vmatpush.msra.mxu0 0.0
    %1435 = vmatpush.msra.mxu0 0.0
    %1436 = vmatpush.msra.mxu0 0.0
    %1437 = vmatpush.msra.mxu0 0.0
    %1438 = vmatpush.msra.mxu0 0.0
    %1439 = vmatpush.msra.mxu0 0.0
    %1440 = vmatpush.msra.mxu0 0.0
    %1441 = vmatpush.msra.mxu0 0.0
    %1442 = vmatpush.msra.mxu0 0.0
    %1443 = vmatpush.msra.mxu0 0.0
    %1444 = vmatpush.msra.mxu0 0.0
    %1445 = vmatpush.msra.mxu0 0.0
    %1446 = vmatpush.msra.mxu0 0.0
    %1447 = vmatpush.msra.mxu0 %v1427
    %1448 = vmatmul.f32.gmra.mxu0 %v1430
    %v1449 = vpop.f32.mrf.mxu0
    %v1450 = vadd.f32 0.0, %v1449
    %1451 = vdwg.mxu0
    %1452 = vrot.lane.b32.xlu0 %v873, 88
    %v1453 = vpop.permute.xlu0 %1452
    %v1456 = vsel %vm160, %v1264, 0
    %1458 = vmatpush.msra.mxu0 0.0
    %1459 = vmatpush.msra.mxu0 0.0
    %1460 = vmatpush.msra.mxu0 0.0
    %1461 = vmatpush.msra.mxu0 0.0
    %1462 = vmatpush.msra.mxu0 0.0
    %1463 = vmatpush.msra.mxu0 0.0
    %1464 = vmatpush.msra.mxu0 0.0
    %1465 = vmatpush.msra.mxu0 0.0
    %1466 = vmatpush.msra.mxu0 0.0
    %1467 = vmatpush.msra.mxu0 0.0
    %1468 = vmatpush.msra.mxu0 0.0
    %1469 = vmatpush.msra.mxu0 0.0
    %1470 = vmatpush.msra.mxu0 0.0
    %1471 = vmatpush.msra.mxu0 0.0
    %1472 = vmatpush.msra.mxu0 0.0
    %1473 = vmatpush.msra.mxu0 %v1453
    %1474 = vmatmul.f32.gmra.mxu0 %v1456
    %v1475 = vpop.f32.mrf.mxu0
    %v1476 = vadd.f32 0.0, %v1475
    %1477 = vdwg.mxu0
    %1478 = vrot.lane.b32.xlu0 %v873, 80
    %v1479 = vpop.permute.xlu0 %1478
    %v1482 = vsel %vm160, %v1279, 0
    %1484 = vmatpush.msra.mxu0 0.0
    %1485 = vmatpush.msra.mxu0 0.0
    %1486 = vmatpush.msra.mxu0 0.0
    %1487 = vmatpush.msra.mxu0 0.0
    %1488 = vmatpush.msra.mxu0 0.0
    %1489 = vmatpush.msra.mxu0 0.0
    %1490 = vmatpush.msra.mxu0 0.0
    %1491 = vmatpush.msra.mxu0 0.0
    %1492 = vmatpush.msra.mxu0 0.0
    %1493 = vmatpush.msra.mxu0 0.0
    %1494 = vmatpush.msra.mxu0 0.0
    %1495 = vmatpush.msra.mxu0 0.0
    %1496 = vmatpush.msra.mxu0 0.0
    %1497 = vmatpush.msra.mxu0 0.0
    %1498 = vmatpush.msra.mxu0 0.0
    %1499 = vmatpush.msra.mxu0 %v1479
    %1500 = vmatmul.f32.gmra.mxu0 %v1482
    %v1501 = vpop.f32.mrf.mxu0
    %v1502 = vadd.f32 0.0, %v1501
    %1503 = vdwg.mxu0
    %1504 = vrot.lane.b32.xlu0 %v873, 72
    %v1505 = vpop.permute.xlu0 %1504
    %v1508 = vsel %vm160, %v1294, 0
    %1510 = vmatpush.msra.mxu0 0.0
    %1511 = vmatpush.msra.mxu0 0.0
    %1512 = vmatpush.msra.mxu0 0.0
    %1513 = vmatpush.msra.mxu0 0.0
    %1514 = vmatpush.msra.mxu0 0.0
    %1515 = vmatpush.msra.mxu0 0.0
    %1516 = vmatpush.msra.mxu0 0.0
    %1517 = vmatpush.msra.mxu0 0.0
    %1518 = vmatpush.msra.mxu0 0.0
    %1519 = vmatpush.msra.mxu0 0.0
    %1520 = vmatpush.msra.mxu0 0.0
    %1521 = vmatpush.msra.mxu0 0.0
    %1522 = vmatpush.msra.mxu0 0.0
    %1523 = vmatpush.msra.mxu0 0.0
    %1524 = vmatpush.msra.mxu0 0.0
    %1525 = vmatpush.msra.mxu0 %v1505
    %1526 = vmatmul.f32.gmra.mxu0 %v1508
    %v1527 = vpop.f32.mrf.mxu0
    %v1528 = vadd.f32 0.0, %v1527
    %1529 = vdwg.mxu0
    %1531 = vrot.lane.b32.xlu0 %v1476, 8
    %v1532 = vpop.permute.xlu0 %1531
    %1535 = vrot.lane.b32.xlu0 %v1502, 16
    %v1536 = vpop.permute.xlu0 %1535
    %1539 = vrot.lane.b32.xlu0 %v1528, 24
    %v1540 = vpop.permute.xlu0 %1539
    %v1542 = vsel %vm160, %v1450, %v1532
    %v1543 = vsel %vm593, %v1542, %v1536
    %v1544 = vsel %vm595, %v1543, %v1540
    %1545 = vrot.lane.b32.xlu0 %v1264, 8
    %v1546 = vpop.permute.xlu0 %1545
    %1548 = vrot.lane.b32.xlu0 %v1279, 16
    %v1549 = vpop.permute.xlu0 %1548
    %1551 = vrot.lane.b32.xlu0 %v1294, 24
    %v1552 = vpop.permute.xlu0 %1551
    %v1554 = vsel %vm160, %v1249, %v1546
    %v1555 = vsel %vm593, %v1554, %v1549
    %v1556 = vsel %vm595, %v1555, %v1552
    %v1558 = vperm.slane %v119, 0
    %v1561 = vsel %vm127, %v1413, 0
    %v1564 = vsel %vm127, %v1544, 0
    %1566 = vmatpush.msra.mxu0 0.0
    %1567 = vmatpush.msra.mxu0 0.0
    %1568 = vmatpush.msra.mxu0 0.0
    %1569 = vmatpush.msra.mxu0 0.0
    %1570 = vmatpush.msra.mxu0 0.0
    %1571 = vmatpush.msra.mxu0 0.0
    %1572 = vmatpush.msra.mxu0 0.0
    %1573 = vmatpush.msra.mxu0 0.0
    %1574 = vmatpush.msra.mxu0 0.0
    %1575 = vmatpush.msra.mxu0 0.0
    %1576 = vmatpush.msra.mxu0 0.0
    %1577 = vmatpush.msra.mxu0 0.0
    %1578 = vmatpush.msra.mxu0 %v102
    %1579 = vmatpush.msra.mxu0 %v101
    %1580 = vmatpush.msra.mxu0 %v100
    %1581 = vmatpush.msra.mxu0 %v99
    %1582 = vmatmul.f32.gmra.mxu0 %v1561
    %v1583 = vpop.f32.mrf.mxu0
    %v1584 = vadd.f32 %v1558, %v1583
    %1585 = vmatmul.f32.gmra.mxu0 %v1564
    %v1586 = vpop.f32.mrf.mxu0
    %v1587 = vadd.f32 %v1558, %v1586
    %1588 = vdwg.mxu0
    %v1589 = vadd.f32 %v809, %v1584
    %v1590 = vadd.f32 %v810, %v1587
    %v1591 = vsel %vm127, %v1589, 0.0
    %1592 = vadd.xlane.f32.xlu0 %v1591
    %v1593 = vpop.xlane.xlu0 %1592
    %v1594 = vsel %vm127, %v1590, 0.0
    %1595 = vadd.xlane.f32.xlu0 %v1594
    %v1596 = vpop.xlane.xlu0 %1595
    %v1597 = vmul.f32 %v1593, %v762
    %v1598 = vmul.f32 %v1596, %v762
    %v1599 = vsub.f32 %v1589, %v1597
    %v1600 = vsub.f32 %v1590, %v1598
    %v1601 = vmul.f32 %v1599, %v1599
    %v1602 = vmul.f32 %v1600, %v1600
    %v1603 = vsel %vm127, %v1601, 0.0
    %1604 = vadd.xlane.f32.xlu0 %v1603
    %v1605 = vpop.xlane.xlu0 %1604
    %v1606 = vsel %vm127, %v1602, 0.0
    %1607 = vadd.xlane.f32.xlu0 %v1606
    %v1608 = vpop.xlane.xlu0 %1607
    %v1609 = vmul.f32 %v1605, %v762
    %v1610 = vmul.f32 %v1608, %v762
    %v1611 = vadd.f32 %v1609, 1e-05
    %v1612 = vadd.f32 %v1610, 1e-05
    %v1613 = vrsqrt.pop %v1611
    %v1614 = vmul.f32 %v1613, %v1611
    %v1615 = vmul.f32 %v1614, %v1613
    %v1616 = vmul.f32 0.5, %v1615
    %v1617 = vsub.f32 1.5, %v1616
    %v1618 = vmul.f32 %v1613, %v1617
    %vm1619 = vweird.f32 %v1611
    %vm1620 = vweird.f32 %v1613
    %vm1621 = vmor %vm1619, %vm1620
    %v1622 = vsel %vm1621, %v1613, %v1618
    %v1623 = vrsqrt.pop %v1612
    %v1624 = vmul.f32 %v1623, %v1612
    %v1625 = vmul.f32 %v1624, %v1623
    %v1626 = vmul.f32 0.5, %v1625
    %v1627 = vsub.f32 1.5, %v1626
    %v1628 = vmul.f32 %v1623, %v1627
    %vm1629 = vweird.f32 %v1612
    %vm1630 = vweird.f32 %v1623
    %vm1631 = vmor %vm1629, %vm1630
    %v1632 = vsel %vm1631, %v1623, %v1628
    %v1633 = vmul.f32 %v1599, %v1622
    %v1634 = vmul.f32 %v1600, %v1632
    %v1635 = vmul.f32 %v1633, %v802
    %v1636 = vmul.f32 %v1634, %v802
    %v1637 = vadd.f32 %v1635, %v807
    %v1638 = vadd.f32 %v1636, %v807
    %v1640 = vperm.slane %v120, 0
    %v1643 = vsel %vm127, %v1637, 0
    %v1646 = vsel %vm127, %v1638, 0
    %1648 = vmatpush.msra.mxu0 0.0
    %1649 = vmatpush.msra.mxu0 0.0
    %1650 = vmatpush.msra.mxu0 0.0
    %1651 = vmatpush.msra.mxu0 0.0
    %1652 = vmatpush.msra.mxu0 0.0
    %1653 = vmatpush.msra.mxu0 0.0
    %1654 = vmatpush.msra.mxu0 0.0
    %1655 = vmatpush.msra.mxu0 0.0
    %1656 = vmatpush.msra.mxu0 0.0
    %1657 = vmatpush.msra.mxu0 0.0
    %1658 = vmatpush.msra.mxu0 0.0
    %1659 = vmatpush.msra.mxu0 0.0
    %1660 = vmatpush.msra.mxu0 %v106
    %1661 = vmatpush.msra.mxu0 %v105
    %1662 = vmatpush.msra.mxu0 %v104
    %1663 = vmatpush.msra.mxu0 %v103
    %1664 = vmatmul.f32.gmra.mxu0 %v1643
    %v1665 = vpop.f32.mrf.mxu0
    %v1666 = vadd.f32 %v1640, %v1665
    %1667 = vmatmul.f32.gmra.mxu0 %v1646
    %v1668 = vpop.f32.mrf.mxu0
    %v1669 = vadd.f32 %v1640, %v1668
    %1670 = vdwg.mxu0
    %v1671 = vmax.f32 %v1666, 0.0
    %v1672 = vmax.f32 %v1669, 0.0
    %v1674 = vperm.slane %v121, 0
    %vm1676 = vcmask 523264
    %v1678 = vsel %vm1676, %v1671, 0
    %v1681 = vsel %vm1676, %v1672, 0
    %1683 = vmatpush.msra.mxu0 0.0
    %1684 = vmatpush.msra.mxu0 0.0
    %1685 = vmatpush.msra.mxu0 0.0
    %1686 = vmatpush.msra.mxu0 0.0
    %1687 = vmatpush.msra.mxu0 0.0
    %1688 = vmatpush.msra.mxu0 0.0
    %1689 = vmatpush.msra.mxu0 0.0
    %1690 = vmatpush.msra.mxu0 0.0
    %1691 = vmatpush.msra.mxu0 %v114
    %1692 = vmatpush.msra.mxu0 %v113
    %1693 = vmatpush.msra.mxu0 %v112
    %1694 = vmatpush.msra.mxu0 %v111
    %1695 = vmatpush.msra.mxu0 %v110
    %1696 = vmatpush.msra.mxu0 %v109
    %1697 = vmatpush.msra.mxu0 %v108
    %1698 = vmatpush.msra.mxu0 %v107
    %1699 = vmatmul.f32.gmra.mxu0 %v1678
    %v1700 = vpop.f32.mrf.mxu0
    %v1701 = vadd.f32 %v1674, %v1700
    %1702 = vmatmul.f32.gmra.mxu0 %v1681
    %v1703 = vpop.f32.mrf.mxu0
    %v1704 = vadd.f32 %v1674, %v1703
    %1705 = vdwg.mxu0
    %v1706 = vadd.f32 %v1637, %v1701
    %v1707 = vadd.f32 %v1638, %v1704
    %v1708 = vsel %vm127, %v1706, 0.0
    %1709 = vadd.xlane.f32.xlu0 %v1708
    %v1710 = vpop.xlane.xlu0 %1709
    %v1711 = vsel %vm127, %v1707, 0.0
    %1712 = vadd.xlane.f32.xlu0 %v1711
    %v1713 = vpop.xlane.xlu0 %1712
    %v1714 = vmul.f32 %v1710, %v762
    %v1715 = vmul.f32 %v1713, %v762
    %v1716 = vsub.f32 %v1706, %v1714
    %v1717 = vsub.f32 %v1707, %v1715
    %v1718 = vmul.f32 %v1716, %v1716
    %v1719 = vmul.f32 %v1717, %v1717
    %v1720 = vsel %vm127, %v1718, 0.0
    %1721 = vadd.xlane.f32.xlu0 %v1720
    %v1722 = vpop.xlane.xlu0 %1721
    %v1723 = vsel %vm127, %v1719, 0.0
    %1724 = vadd.xlane.f32.xlu0 %v1723
    %v1725 = vpop.xlane.xlu0 %1724
    %v1726 = vmul.f32 %v1722, %v762
    %v1727 = vmul.f32 %v1725, %v762
    %v1728 = vadd.f32 %v1726, 1e-05
    %v1729 = vadd.f32 %v1727, 1e-05
    %v1730 = vrsqrt.pop %v1728
    %v1731 = vmul.f32 %v1730, %v1728
    %v1732 = vmul.f32 %v1731, %v1730
    %v1733 = vmul.f32 0.5, %v1732
    %v1734 = vsub.f32 1.5, %v1733
    %v1735 = vmul.f32 %v1730, %v1734
    %vm1736 = vweird.f32 %v1728
    %vm1737 = vweird.f32 %v1730
    %vm1738 = vmor %vm1736, %vm1737
    %v1739 = vsel %vm1738, %v1730, %v1735
    %v1740 = vrsqrt.pop %v1729
    %v1741 = vmul.f32 %v1740, %v1729
    %v1742 = vmul.f32 %v1741, %v1740
    %v1743 = vmul.f32 0.5, %v1742
    %v1744 = vsub.f32 1.5, %v1743
    %v1745 = vmul.f32 %v1740, %v1744
    %vm1746 = vweird.f32 %v1729
    %vm1747 = vweird.f32 %v1740
    %vm1748 = vmor %vm1746, %vm1747
    %v1749 = vsel %vm1748, %v1740, %v1745
    %v1750 = vmul.f32 %v1716, %v1739
    %v1751 = vmul.f32 %v1717, %v1749
    %v1752 = vmul.f32 %v1750, %v802
    %v1753 = vmul.f32 %v1751, %v802
    %v1754 = vadd.f32 %v1752, %v807
    %v1755 = vadd.f32 %v1753, %v807
    %1758 = vrot.lane.b32.xlu0 %v1425, 32
    %v1759 = vpop.permute.xlu0 %1758
    %1760 = vrot.lane.b32.xlu0 %v1556, 32
    %v1761 = vpop.permute.xlu0 %1760
    %v1764 = vsel %vm127, %v1754, %v1759
    %v1765 = vsel %vm127, %v1755, %v1761
    %1766 = vst.msk [vmem:[#allocation10] sm:$0xff] %vm1676, %v1764
    %1767 = vst.msk [vmem:[#allocation10 + $0x8] sm:$0xff] %vm1676, %v1765
    // Predicated region
    $region34: #{tpu_custom_call.1} parent=1 // pred_check
      _
    $region35: #{tpu_custom_call.1} parent=1 // pred_check_branch
      %1769 = sbr.rel (0) target = $region37
    $region36: #{tpu_custom_call.1} parent=1 // pred_region
      %1771 = vsyncadd [#allocation4], 0
      %s1772 = sshll.u32 [#allocation10], 4
      %s1773 = int_to_ptr.vmem [resolvable:$true] %s1772
      %s1774 = sshll.u32 %s4, 4
      %s1775 = int_to_ptr.hbm [resolvable:$true] %s1774
      %1780 = dma.vmem_to_hbm [thread:$0]  %s1773, 256, %s1775, [#allocation4], 128, 128, 8
    $region37: #{tpu_custom_call.1} parent=1 // pred_fallthru
      _
    // Predicated region
    $region38: #{tpu_custom_call.1} parent=1 // pred_check
      _
    $region39: #{tpu_custom_call.1} parent=1 // pred_check_branch
      %1782 = sbr.rel (0) target = $region41
    $region40: #{tpu_custom_call.1} parent=1 // pred_region
      %1784 = dma.done [#allocation4], 256
    $region41: #{tpu_custom_call.1} parent=1 // pred_fallthru
      _
    %1785 = vsyncpa [#allocation3], 1
    %1786 = vsyncpa [#allocation6], 1
    %1787 = vsyncpa [#allocation9], 1
    %1788 = vsyncpa [#allocation4], 1

</llo_original>
